<compile_context>
chip_gen: v6e
topology: v6e:2x2x1
jax: 0.10.0
libtpu: 0.0.40
codegen_flags: <defaults>
</compile_context>

<pallas_src>
import jax
import jax.numpy as jnp
from jax.experimental import pallas as pl
from jax.experimental.pallas import tpu as pltpu


def _round_up(x, m):
    return (x + m - 1) // m * m


def _choose_batch_tile(B, max_tb=1024):
    """Pick the batch tile: largest multiple-of-8 tile <= max_tb that keeps
    padding waste small and (for big batches) gives >= 2 grid steps so v7x's
    second TensorCore has work."""
    B8 = _round_up(max(B, 1), 8)
    if B8 <= 16:                       # tiny batch: single tile
        return B8
    limit = min(max_tb, _round_up((B8 + 1) // 2, 8))   # guarantee >= 2 steps
    best_tb, best_waste = 16, None
    for tb in (1024, 512, 256, 128, 64, 32, 16):
        if tb > limit:
            continue
        waste = _round_up(B8, tb) - B8
        if waste * 8 <= B8:            # <= 12.5% padded rows: take largest such
            return tb
        if best_waste is None or waste < best_waste:
            best_tb, best_waste = tb, waste
    return best_tb


# ----------------------------------------------------------------------------
# Pallas kernel: normalize + concat (split matmul) + MLP head, one batch tile
# ----------------------------------------------------------------------------
def _classifier_kernel(img_ref, txt_ref,
                       w1a_ref, w1b_ref, b1_ref,
                       w2_ref, b2_ref,
                       w3_ref, b3_ref,
                       out_ref):
    # Features streamed as bf16 (halves HBM bytes); norm math stays in f32.
    img = img_ref[...].astype(jnp.float32)                      # [TB, 512]
    txt = txt_ref[...].astype(jnp.float32)                      # [TB, 512]

    # L2-normalize along the last dim (== x / x.norm(dim=-1, keepdim=True)).
    # rsqrt goes to the EUP slot; multiplies ride the VPU. Tiny eps guards
    # against all-zero rows without measurably changing nonzero rows.
    img = img * jax.lax.rsqrt(jnp.sum(img * img, axis=-1, keepdims=True) + 1e-12)
    txt = txt * jax.lax.rsqrt(jnp.sum(txt * txt, axis=-1, keepdims=True) + 1e-12)

    # combined = concat([img, txt], dim=1); combined @ W1 as a split matmul
    # (avoids a lane-dim concat). bf16 MXU operands, f32 accumulation.
    h1 = (jnp.dot(img.astype(jnp.bfloat16), w1a_ref[...],
                  preferred_element_type=jnp.float32)
          + jnp.dot(txt.astype(jnp.bfloat16), w1b_ref[...],
                    preferred_element_type=jnp.float32)
          + b1_ref[...])                                         # [TB, 512] f32
    h1 = jnp.maximum(h1, 0.0)                                    # ReLU

    # Dropout(0.2): identity in inference mode (matches torch.no_grad path).
    # TODO(synk): training-mode stochastic dropout not implemented.

    h2 = (jnp.dot(h1.astype(jnp.bfloat16), w2_ref[...],
                  preferred_element_type=jnp.float32)
          + b2_ref[...])                                         # [TB, 256] f32
    h2 = jnp.maximum(h2, 0.0)                                    # ReLU

    # Linear(256, 1) as a VPU multiply + cross-sublane reduce on the transposed
    # activations: emits a lane-dense (1, TB) row (unmasked vector stores)
    # instead of a masked 1-lane (TB, 1) column, and avoids an N=1 MXU matmul.
    h2t = h2.T                                                   # [256, TB]
    out_ref[...] = (jnp.sum(h2t * w3_ref[...], axis=0, keepdims=True)
                    + b3_ref[...])                               # [1, TB] f32


def disdrive_classifier_head(image_features, text_features, params, *, max_tb=1024):
    """image_features, text_features: [B, 512]. Returns [B, 1] float32."""
    B = image_features.shape[0]
    TB = _choose_batch_tile(B, max_tb)
    B_pad = _round_up(B, TB)

    # Stream the features in bf16 (the only per-row HBM traffic of the kernel).
    image_features = image_features.astype(jnp.bfloat16)
    text_features = text_features.astype(jnp.bfloat16)
    if B_pad != B:
        pad = ((0, B_pad - B), (0, 0))
        # pad with ones so padded rows have a well-defined (non-NaN) L2 norm
        image_features = jnp.pad(image_features, pad, constant_values=1.0)
        text_features = jnp.pad(text_features, pad, constant_values=1.0)

    # Classifier head weights. W1 split into the two 512x512 halves used by
    # the split matmul; matmul weights pre-cast to bf16 once (they stay
    # resident in VMEM across the whole batch grid).
    w1 = params["w1"]
    w1a = w1[0:512, :].astype(jnp.bfloat16)              # img half  [512, 512]
    w1b = w1[512:1024, :].astype(jnp.bfloat16)           # txt half  [512, 512]
    b1 = params["b1"].astype(jnp.float32)                # [1, 512]
    w2 = params["w2"].astype(jnp.bfloat16)               # [512, 256]
    b2 = params["b2"].astype(jnp.float32)                # [1, 256]
    w3_col = params["w3"].reshape(256, 1).astype(jnp.float32)    # [256, 1]
    b3 = params["b3"].astype(jnp.float32)                # [1, 1]

    n_tiles = B_pad // TB
    batch_map = lambda i: (i, 0)
    const_map = lambda i: (0, 0)

    out_rows = pl.pallas_call(
        _classifier_kernel,
        out_shape=jax.ShapeDtypeStruct((n_tiles, TB), jnp.float32),
        grid=(n_tiles,),
        in_specs=[
            pl.BlockSpec((TB, 512), batch_map),    # img features (pipelined, bf16)
            pl.BlockSpec((TB, 512), batch_map),    # txt features (pipelined, bf16)
            pl.BlockSpec((512, 512), const_map),   # w1a (resident)
            pl.BlockSpec((512, 512), const_map),   # w1b (resident)
            pl.BlockSpec((1, 512), const_map),     # b1
            pl.BlockSpec((512, 256), const_map),   # w2
            pl.BlockSpec((1, 256), const_map),     # b2
            pl.BlockSpec((256, 1), const_map),     # w3 (column)
            pl.BlockSpec((1, 1), const_map),       # b3
        ],
        out_specs=pl.BlockSpec((1, TB), batch_map),   # lane-dense output row
        compiler_params=pltpu.CompilerParams(
            dimension_semantics=("parallel",),        # megacore batch sharding
            vmem_limit_bytes=32 * 1024 * 1024),       # working set + headroom
    )(image_features, text_features, w1a, w1b, b1, w2, b2, w3_col, b3)

    return out_rows.reshape(B_pad, 1)[:B]


# ----------------------------------------------------------------------------
# Synthetic frozen "CLIP" encoders (deterministic stand-ins) -- plain JAX glue
# ----------------------------------------------------------------------------
def encode_image_stub(images, w_img):
    # images: [B, C, H, W] (NCHW, like PyTorch) -> flatten -> linear to 512.
    # Emit bf16 so the feature tensor written to HBM is half-size (the head
    # kernel streams it in bf16 anyway).
    B = images.shape[0]
    flat = images.reshape(B, -1).astype(jnp.float32)
    return (flat @ w_img).astype(jnp.bfloat16)          # [B, 512] bf16


def encode_text_stub(texts, embed_table):
    # texts: [B, S] int32 token ids -> embed -> mean pool over sequence
    emb = embed_table[texts]                            # [B, S, 512]
    return jnp.mean(emb, axis=1).astype(jnp.bfloat16)   # [B, 512] bf16


def disdrive_forward(images, texts, params):
    img_feat = encode_image_stub(images, params["w_img"])
    txt_feat = encode_text_stub(texts, params["embed"])
    return disdrive_classifier_head(img_feat, txt_feat, params)


# ----------------------------------------------------------------------------
# Deterministic parameter init
# ----------------------------------------------------------------------------
def init_params(key, img_flat_dim, vocab):
    ks = jax.random.split(key, 8)
    scale = 0.02
    return {
        # synthetic CLIP stand-in
        "w_img": scale * jax.random.normal(ks[0], (img_flat_dim, 512), jnp.float32),
        "embed": scale * jax.random.normal(ks[1], (vocab, 512), jnp.float32),
        # classifier head (nn.Linear weights stored as [in, out]; biases [1, out])
        "w1": scale * jax.random.normal(ks[2], (1024, 512), jnp.float32),
        "b1": scale * jax.random.normal(ks[3], (1, 512), jnp.float32),
        "w2": scale * jax.random.normal(ks[4], (512, 256), jnp.float32),
        "b2": scale * jax.random.normal(ks[5], (1, 256), jnp.float32),
        "w3": scale * jax.random.normal(ks[6], (256, 1), jnp.float32),
        "b3": scale * jax.random.normal(ks[7], (1, 1), jnp.float32),
    }


# ----------------------------------------------------------------------------
# Pure-JAX reference (f32) for a sanity check of the kernel math
# ----------------------------------------------------------------------------
def reference_head(img_feat, txt_feat, p):
    img = img_feat / jnp.linalg.norm(img_feat, axis=-1, keepdims=True)
    txt = txt_feat / jnp.linalg.norm(txt_feat, axis=-1, keepdims=True)
    x = jnp.concatenate([img, txt], axis=1)
    h1 = jnp.maximum(x @ p["w1"] + p["b1"], 0.0)
    h2 = jnp.maximum(h1 @ p["w2"] + p["b2"], 0.0)
    return h2 @ p["w3"] + p["b3"]


if __name__ == "__main__":
    key = jax.random.PRNGKey(0)
    k_img, k_txt, k_par = jax.random.split(key, 3)

    B, C, H, W = 2, 3, 16, 16   # small NCHW images
    S, VOCAB = 8, 32            # short token sequences

    images = jax.random.normal(k_img, (B, C, H, W), jnp.float32)
    texts = jax.random.randint(k_txt, (B, S), 0, VOCAB, jnp.int32)

    params = init_params(k_par, C * H * W, VOCAB)

    out = jax.block_until_ready(disdrive_forward(images, texts, params))
    assert out.shape == (B, 1) and out.dtype == jnp.float32

    # Sanity check against a pure-JAX f32 reference fed the SAME bf16-rounded
    # features (kernel matmuls run in bf16 with f32 accumulation, so allow a
    # modest tolerance).
    img_feat = encode_image_stub(images, params["w_img"]).astype(jnp.float32)
    txt_feat = encode_text_stub(texts, params["embed"]).astype(jnp.float32)
    ref = reference_head(img_feat, txt_feat, params)
    assert jnp.allclose(out, ref, atol=2e-2, rtol=5e-2), (out, ref)

    print("KERNEL_OK")
</pallas_src>

<mosaic_0001>
module attributes {stable_mosaic.version = 11 : i64} {
  func.func @_classifier_kernel(%arg0: i32, %arg1: memref<8x512xbf16, #tpu.memory_space<vmem>>, %arg2: memref<8x512xbf16, #tpu.memory_space<vmem>>, %arg3: memref<512x512xbf16, #tpu.memory_space<vmem>>, %arg4: memref<512x512xbf16, #tpu.memory_space<vmem>>, %arg5: memref<1x512xf32, #tpu.memory_space<vmem>>, %arg6: memref<512x256xbf16, #tpu.memory_space<vmem>>, %arg7: memref<1x256xf32, #tpu.memory_space<vmem>>, %arg8: memref<256x1xf32, #tpu.memory_space<vmem>>, %arg9: memref<1x1xf32, #tpu.memory_space<vmem>>, %arg10: memref<1x8xf32, #tpu.memory_space<vmem>>) attributes {dimension_semantics = [#tpu.dimension_semantics<parallel>], iteration_bounds = array<i64: 1>, scalar_prefetch = 0 : i64, scratch_operands = 0 : i64, tpu.core_type = #tpu.core_type<tc>, window_params = [{transform_indices = @transform_0, window_bounds = array<i64: 8, 512>}, {transform_indices = @transform_1, window_bounds = array<i64: 8, 512>}, {pipeline_mode = #tpu.pipeline_mode<synchronous>, transform_indices = @transform_2, window_bounds = array<i64: 512, 512>}, {pipeline_mode = #tpu.pipeline_mode<synchronous>, transform_indices = @transform_3, window_bounds = array<i64: 512, 512>}, {pipeline_mode = #tpu.pipeline_mode<synchronous>, transform_indices = @transform_4, window_bounds = array<i64: 1, 512>}, {pipeline_mode = #tpu.pipeline_mode<synchronous>, transform_indices = @transform_5, window_bounds = array<i64: 512, 256>}, {pipeline_mode = #tpu.pipeline_mode<synchronous>, transform_indices = @transform_6, window_bounds = array<i64: 1, 256>}, {pipeline_mode = #tpu.pipeline_mode<synchronous>, transform_indices = @transform_7, window_bounds = array<i64: 256, 1>}, {pipeline_mode = #tpu.pipeline_mode<synchronous>, transform_indices = @transform_8, window_bounds = array<i64: 1, 1>}, {transform_indices = @transform_9, window_bounds = array<i64: 1, 8>}]} {
    %c0 = arith.constant 0 : index
    %c0_0 = arith.constant 0 : index
    %0 = vector.load %arg1[%c0, %c0_0] : memref<8x512xbf16, #tpu.memory_space<vmem>>, vector<8x512xbf16>
    %1 = arith.extf %0 : vector<8x512xbf16> to vector<8x512xf32>
    %c0_1 = arith.constant 0 : index
    %c0_2 = arith.constant 0 : index
    %2 = vector.load %arg2[%c0_1, %c0_2] : memref<8x512xbf16, #tpu.memory_space<vmem>>, vector<8x512xbf16>
    %3 = arith.extf %2 : vector<8x512xbf16> to vector<8x512xf32>
    %4 = arith.mulf %1, %1 : vector<8x512xf32>
    %cst = arith.constant dense<0.000000e+00> : vector<8xf32>
    %5 = vector.multi_reduction <add>, %4, %cst [1] : vector<8x512xf32> to vector<8xf32>
    %6 = vector.shape_cast %5 : vector<8xf32> to vector<8x1xf32>
    %cst_3 = arith.constant 9.99999996E-13 : f32
    %7 = vector.broadcast %cst_3 : f32 to vector<8x1xf32>
    %8 = arith.addf %6, %7 : vector<8x1xf32>
    %9 = math.rsqrt %8 : vector<8x1xf32>
    %10 = vector.broadcast %9 : vector<8x1xf32> to vector<8x512xf32>
    %11 = arith.mulf %1, %10 : vector<8x512xf32>
    %12 = arith.mulf %3, %3 : vector<8x512xf32>
    %cst_4 = arith.constant dense<0.000000e+00> : vector<8xf32>
    %13 = vector.multi_reduction <add>, %12, %cst_4 [1] : vector<8x512xf32> to vector<8xf32>
    %14 = vector.shape_cast %13 : vector<8xf32> to vector<8x1xf32>
    %cst_5 = arith.constant 9.99999996E-13 : f32
    %15 = vector.broadcast %cst_5 : f32 to vector<8x1xf32>
    %16 = arith.addf %14, %15 : vector<8x1xf32>
    %17 = math.rsqrt %16 : vector<8x1xf32>
    %18 = vector.broadcast %17 : vector<8x1xf32> to vector<8x512xf32>
    %19 = arith.mulf %3, %18 : vector<8x512xf32>
    %20 = arith.truncf %11 : vector<8x512xf32> to vector<8x512xbf16>
    %c0_6 = arith.constant 0 : index
    %c0_7 = arith.constant 0 : index
    %21 = vector.load %arg3[%c0_6, %c0_7] : memref<512x512xbf16, #tpu.memory_space<vmem>>, vector<512x512xbf16>
    %cst_8 = arith.constant dense<0.000000e+00> : vector<8x512xf32>
    %22 = tpu.matmul %20, %21, %cst_8 {dimension_numbers = #tpu.dot_dimension_numbers<[1], [0], [0], [1], [0, 0, 1, 1], [], []>} : vector<8x512xbf16>, vector<512x512xbf16>, vector<8x512xf32> -> vector<8x512xf32>
    %23 = arith.truncf %19 : vector<8x512xf32> to vector<8x512xbf16>
    %c0_9 = arith.constant 0 : index
    %c0_10 = arith.constant 0 : index
    %24 = vector.load %arg4[%c0_9, %c0_10] : memref<512x512xbf16, #tpu.memory_space<vmem>>, vector<512x512xbf16>
    %cst_11 = arith.constant dense<0.000000e+00> : vector<8x512xf32>
    %25 = tpu.matmul %23, %24, %cst_11 {dimension_numbers = #tpu.dot_dimension_numbers<[1], [0], [0], [1], [0, 0, 1, 1], [], []>} : vector<8x512xbf16>, vector<512x512xbf16>, vector<8x512xf32> -> vector<8x512xf32>
    %26 = arith.addf %22, %25 : vector<8x512xf32>
    %c0_12 = arith.constant 0 : index
    %c0_13 = arith.constant 0 : index
    %27 = vector.load %arg5[%c0_12, %c0_13] : memref<1x512xf32, #tpu.memory_space<vmem>>, vector<1x512xf32>
    %28 = vector.broadcast %27 : vector<1x512xf32> to vector<8x512xf32>
    %29 = arith.addf %26, %28 : vector<8x512xf32>
    %cst_14 = arith.constant 0.000000e+00 : f32
    %30 = vector.broadcast %cst_14 : f32 to vector<8x512xf32>
    %31 = arith.maximumf %29, %30 : vector<8x512xf32>
    %32 = arith.truncf %31 : vector<8x512xf32> to vector<8x512xbf16>
    %c0_15 = arith.constant 0 : index
    %c0_16 = arith.constant 0 : index
    %33 = vector.load %arg6[%c0_15, %c0_16] : memref<512x256xbf16, #tpu.memory_space<vmem>>, vector<512x256xbf16>
    %cst_17 = arith.constant dense<0.000000e+00> : vector<8x256xf32>
    %34 = tpu.matmul %32, %33, %cst_17 {dimension_numbers = #tpu.dot_dimension_numbers<[1], [0], [0], [1], [0, 0, 1, 1], [], []>} : vector<8x512xbf16>, vector<512x256xbf16>, vector<8x256xf32> -> vector<8x256xf32>
    %c0_18 = arith.constant 0 : index
    %c0_19 = arith.constant 0 : index
    %35 = vector.load %arg7[%c0_18, %c0_19] : memref<1x256xf32, #tpu.memory_space<vmem>>, vector<1x256xf32>
    %36 = vector.broadcast %35 : vector<1x256xf32> to vector<8x256xf32>
    %37 = arith.addf %34, %36 : vector<8x256xf32>
    %cst_20 = arith.constant 0.000000e+00 : f32
    %38 = vector.broadcast %cst_20 : f32 to vector<8x256xf32>
    %39 = arith.maximumf %37, %38 : vector<8x256xf32>
    %40 = tpu.transpose %39, [1, 0] : vector<8x256xf32> -> vector<256x8xf32>
    %c0_21 = arith.constant 0 : index
    %c0_22 = arith.constant 0 : index
    %41 = vector.load %arg8[%c0_21, %c0_22] : memref<256x1xf32, #tpu.memory_space<vmem>>, vector<256x1xf32>
    %42 = vector.broadcast %41 : vector<256x1xf32> to vector<256x8xf32>
    %43 = arith.mulf %40, %42 : vector<256x8xf32>
    %cst_23 = arith.constant dense<0.000000e+00> : vector<8xf32>
    %44 = vector.multi_reduction <add>, %43, %cst_23 [0] : vector<256x8xf32> to vector<8xf32>
    %45 = vector.shape_cast %44 : vector<8xf32> to vector<1x8xf32>
    %c0_24 = arith.constant 0 : index
    %c0_25 = arith.constant 0 : index
    %46 = vector.load %arg9[%c0_24, %c0_25] : memref<1x1xf32, #tpu.memory_space<vmem>>, vector<1x1xf32>
    %47 = vector.broadcast %46 : vector<1x1xf32> to vector<1x8xf32>
    %48 = arith.addf %45, %47 : vector<1x8xf32>
    %c0_26 = arith.constant 0 : index
    %c0_27 = arith.constant 0 : index
    %49 = vector.load %arg10[%c0_26, %c0_27] : memref<1x8xf32, #tpu.memory_space<vmem>>, vector<1x8xf32>
    tpu.vector_store %arg10[%c0_26, %c0_27], %48 {strides = array<i32>} : memref<1x8xf32, #tpu.memory_space<vmem>>, vector<1x8xf32>,
    return
  }
  func.func @transform_0(%arg0: i32) -> (i32, i32) {
    %c0_i32 = arith.constant 0 : i32
    %c0_i32_0 = arith.constant 0 : i32
    return %arg0, %c0_i32 : i32, i32
  }
  func.func @transform_1(%arg0: i32) -> (i32, i32) {
    %c0_i32 = arith.constant 0 : i32
    %c0_i32_0 = arith.constant 0 : i32
    return %arg0, %c0_i32 : i32, i32
  }
  func.func @transform_2(%arg0: i32) -> (i32, i32) {
    %c0_i32 = arith.constant 0 : i32
    %c0_i32_0 = arith.constant 0 : i32
    %c0_i32_1 = arith.constant 0 : i32
    return %c0_i32, %c0_i32_0 : i32, i32
  }
  func.func @transform_3(%arg0: i32) -> (i32, i32) {
    %c0_i32 = arith.constant 0 : i32
    %c0_i32_0 = arith.constant 0 : i32
    %c0_i32_1 = arith.constant 0 : i32
    return %c0_i32, %c0_i32_0 : i32, i32
  }
  func.func @transform_4(%arg0: i32) -> (i32, i32) {
    %c0_i32 = arith.constant 0 : i32
    %c0_i32_0 = arith.constant 0 : i32
    %c0_i32_1 = arith.constant 0 : i32
    return %c0_i32, %c0_i32_0 : i32, i32
  }
  func.func @transform_5(%arg0: i32) -> (i32, i32) {
    %c0_i32 = arith.constant 0 : i32
    %c0_i32_0 = arith.constant 0 : i32
    %c0_i32_1 = arith.constant 0 : i32
    return %c0_i32, %c0_i32_0 : i32, i32
  }
  func.func @transform_6(%arg0: i32) -> (i32, i32) {
    %c0_i32 = arith.constant 0 : i32
    %c0_i32_0 = arith.constant 0 : i32
    %c0_i32_1 = arith.constant 0 : i32
    return %c0_i32, %c0_i32_0 : i32, i32
  }
  func.func @transform_7(%arg0: i32) -> (i32, i32) {
    %c0_i32 = arith.constant 0 : i32
    %c0_i32_0 = arith.constant 0 : i32
    %c0_i32_1 = arith.constant 0 : i32
    return %c0_i32, %c0_i32_0 : i32, i32
  }
  func.func @transform_8(%arg0: i32) -> (i32, i32) {
    %c0_i32 = arith.constant 0 : i32
    %c0_i32_0 = arith.constant 0 : i32
    %c0_i32_1 = arith.constant 0 : i32
    return %c0_i32, %c0_i32_0 : i32, i32
  }
  func.func @transform_9(%arg0: i32) -> (i32, i32) {
    %c0_i32 = arith.constant 0 : i32
    %c0_i32_0 = arith.constant 0 : i32
    return %arg0, %c0_i32 : i32, i32
  }
}

</mosaic_0001>

<llo_original>
// kernel: tpu_custom_call.1
$region0: #{tpu_custom_call.1}
  #allocation0 [shape = 'u32[]', space=smem, size = 0x4, offset = 0x4, fixed_abs, tag = 'smem constant byte address 0x4 - core index']
  #allocation1 [shape = 'u32[144,128]{1,0:T(1,128)}', space=vmem, size = 0x12000, scoped, tag = 'internal scratch']
  #allocation2 [shape = 'f32[1,1]{1,0:T(1,128)S(1)}', space=vmem, size = 0x200, scoped, tag = 'scoped memory for tpu_custom_call.1']
  %s0 = inlined_call_operand.vmem [shape: bf16[8,512], index: 0, kind: input, shape index: {}]
  %s1 = inlined_call_operand.vmem [shape: bf16[8,512], index: 1, kind: input, shape index: {}]
  %s2 = inlined_call_operand.hbm [shape: bf16[512,512], index: 2, kind: input, shape index: {}]
  %s3 = inlined_call_operand.hbm [shape: bf16[512,512], index: 3, kind: input, shape index: {}]
  %s4 = inlined_call_operand.vmem [shape: f32[1,512], index: 4, kind: input, shape index: {}]
  %s5 = inlined_call_operand.hbm [shape: bf16[512,256], index: 5, kind: input, shape index: {}]
  %s6 = inlined_call_operand.vmem [shape: f32[1,256], index: 6, kind: input, shape index: {}]
  %s7 = inlined_call_operand.vmem [shape: f32[256,1], index: 7, kind: input, shape index: {}]
  %s8 = inlined_call_operand.<no memory space> [shape: f32[1,1], index: 8, kind: input, shape index: {}]
  %s9 = inlined_call_operand.hbm [shape: f32[1,8], index: 9, kind: output, shape index: {}]
  %s10 = sld [smem:[#allocation0]]
  $region58: #{tpu_custom_call.1} parent=0
    _
  %s12 = ssub.s32 1, %s10
  %s13 = scalar_select 0, %s12, %s10
  %v14 = vstv %s8
  %15 = vst [vmem:[#allocation2] sm:$0x1] %v14
  $region1: #{tpu_custom_call.1} parent=0
    #allocation3 [shape = 'u8[524288]{0}', space=vmem, size = 0x80000, scoped, tag = 'input window, operand 2, single buffered']
    #allocation4 [shape = 's32[1]{0}', space=sflag, size = 0x4, scoped, tag = 'scoped memory for tpu_custom_call.1']
    #allocation5 [shape = 's32[1]{0}', space=sflag, size = 0x4, scoped, tag = 'scoped memory for tpu_custom_call.1']
    #allocation6 [shape = 'u8[524288]{0}', space=vmem, size = 0x80000, scoped, tag = 'input window, operand 3, single buffered']
    #allocation7 [shape = 's32[1]{0}', space=sflag, size = 0x4, scoped, tag = 'scoped memory for tpu_custom_call.1']
    #allocation8 [shape = 'u8[262144]{0}', space=vmem, size = 0x40000, scoped, tag = 'input window, operand 5, single buffered']
    #allocation9 [shape = 'u8[512]{0}', space=vmem, size = 0x400, scoped, tag = 'output window, operand 0, single buffered']
    %16 = vsyncpa [#allocation4], 0
    %17 = vsyncpa [#allocation7], 0
    %18 = vsyncpa [#allocation5], 0
    // Predicated region
    $region2: #{tpu_custom_call.1} parent=1 // pred_check
      _
    $region3: #{tpu_custom_call.1} parent=1 // pred_check_branch
      %20 = sbr.rel (0) target = $region5
    $region4: #{tpu_custom_call.1} parent=1 // pred_region
      _
    $region5: #{tpu_custom_call.1} parent=1 // pred_fallthru
      _
    // Predicated region
    $region6: #{tpu_custom_call.1} parent=1 // pred_check
      _
    $region7: #{tpu_custom_call.1} parent=1 // pred_check_branch
      %22 = sbr.rel (0) target = $region9
    $region8: #{tpu_custom_call.1} parent=1 // pred_region
      _
    $region9: #{tpu_custom_call.1} parent=1 // pred_fallthru
      _
    // Predicated region
    $region10: #{tpu_custom_call.1} parent=1 // pred_check
      _
    $region11: #{tpu_custom_call.1} parent=1 // pred_check_branch
      %24 = sbr.rel (0) target = $region13
    $region12: #{tpu_custom_call.1} parent=1 // pred_region
      %s26 = ssub.s32 16384, 16384
      %27 = vsyncadd [#allocation4], %s26
      %s28 = sshll.u32 [#allocation3], 4
      %s29 = int_to_ptr.vmem [resolvable:$true] %s28
      %34 = dma.hbm_to_vmem [thread:$0]  %s2, 16384, %s29, [#allocation4], 256, 256, 16
    $region13: #{tpu_custom_call.1} parent=1 // pred_fallthru
      _
    // Predicated region
    $region14: #{tpu_custom_call.1} parent=1 // pred_check
      _
    $region15: #{tpu_custom_call.1} parent=1 // pred_check_branch
      %36 = sbr.rel (0) target = $region17
    $region16: #{tpu_custom_call.1} parent=1 // pred_region
      %s38 = ssub.s32 16384, 16384
      %39 = vsyncadd [#allocation7], %s38
      %s40 = sshll.u32 [#allocation6], 4
      %s41 = int_to_ptr.vmem [resolvable:$true] %s40
      %46 = dma.hbm_to_vmem [thread:$0]  %s3, 16384, %s41, [#allocation7], 256, 256, 16
    $region17: #{tpu_custom_call.1} parent=1 // pred_fallthru
      _
    // Predicated region
    $region18: #{tpu_custom_call.1} parent=1 // pred_check
      _
    $region19: #{tpu_custom_call.1} parent=1 // pred_check_branch
      %48 = sbr.rel (0) target = $region21
    $region20: #{tpu_custom_call.1} parent=1 // pred_region
      _
    $region21: #{tpu_custom_call.1} parent=1 // pred_fallthru
      _
    // Predicated region
    $region22: #{tpu_custom_call.1} parent=1 // pred_check
      _
    $region23: #{tpu_custom_call.1} parent=1 // pred_check_branch
      %50 = sbr.rel (0) target = $region25
    $region24: #{tpu_custom_call.1} parent=1 // pred_region
      %s52 = ssub.s32 8192, 8192
      %53 = vsyncadd [#allocation7], %s52
      %s54 = sshll.u32 [#allocation8], 4
      %s55 = int_to_ptr.vmem [resolvable:$true] %s54
      %60 = dma.hbm_to_vmem [thread:$0]  %s5, 8192, %s55, [#allocation7], 128, 128, 8
    $region25: #{tpu_custom_call.1} parent=1 // pred_fallthru
      _
    // Predicated region
    $region26: #{tpu_custom_call.1} parent=1 // pred_check
      _
    $region27: #{tpu_custom_call.1} parent=1 // pred_check_branch
      %62 = sbr.rel (0) target = $region29
    $region28: #{tpu_custom_call.1} parent=1 // pred_region
      _
    $region29: #{tpu_custom_call.1} parent=1 // pred_fallthru
      _
    // Predicated region
    $region30: #{tpu_custom_call.1} parent=1 // pred_check
      _
    $region31: #{tpu_custom_call.1} parent=1 // pred_check_branch
      %64 = sbr.rel (0) target = $region33
    $region32: #{tpu_custom_call.1} parent=1 // pred_region
      _
    $region33: #{tpu_custom_call.1} parent=1 // pred_fallthru
      _
    // Predicated region
    $region34: #{tpu_custom_call.1} parent=1 // pred_check
      _
    $region35: #{tpu_custom_call.1} parent=1 // pred_check_branch
      %66 = sbr.rel (0) target = $region37
    $region36: #{tpu_custom_call.1} parent=1 // pred_region
      _
    $region37: #{tpu_custom_call.1} parent=1 // pred_fallthru
      _
    // Predicated region
    $region38: #{tpu_custom_call.1} parent=1 // pred_check
      _
    $region39: #{tpu_custom_call.1} parent=1 // pred_check_branch
      %68 = sbr.rel (0) target = $region41
    $region40: #{tpu_custom_call.1} parent=1 // pred_region
      %69 = dma.done [#allocation4], 16384
    $region41: #{tpu_custom_call.1} parent=1 // pred_fallthru
      _
    // Predicated region
    $region42: #{tpu_custom_call.1} parent=1 // pred_check
      _
    $region43: #{tpu_custom_call.1} parent=1 // pred_check_branch
      %71 = sbr.rel (0) target = $region45
    $region44: #{tpu_custom_call.1} parent=1 // pred_region
      %72 = dma.done [#allocation7], 16384
    $region45: #{tpu_custom_call.1} parent=1 // pred_fallthru
      _
    // Predicated region
    $region46: #{tpu_custom_call.1} parent=1 // pred_check
      _
    $region47: #{tpu_custom_call.1} parent=1 // pred_check_branch
      %74 = sbr.rel (0) target = $region49
    $region48: #{tpu_custom_call.1} parent=1 // pred_region
      %75 = dma.done [#allocation7], 8192
    $region49: #{tpu_custom_call.1} parent=1 // pred_fallthru
      _
    %v76 = vld [vmem:[%s0] sm:$0xff]
    %v77 = vld [vmem:[%s0 + $0x8] sm:$0xff]
    %v78 = vunpack.c.l.bf16 %v76
    %v79 = vunpack.c.h.bf16 %v76
    %v80 = vunpack.c.l.bf16 %v77
    %v81 = vunpack.c.h.bf16 %v77
    %v82 = vld [vmem:[%s1] sm:$0xff]
    %v83 = vld [vmem:[%s1 + $0x8] sm:$0xff]
    %v84 = vunpack.c.l.bf16 %v82
    %v85 = vunpack.c.h.bf16 %v82
    %v86 = vunpack.c.l.bf16 %v83
    %v87 = vunpack.c.h.bf16 %v83
    %v88 = vmul.f32 %v78, %v78
    %v89 = vmul.f32 %v79, %v79
    %v90 = vmul.f32 %v80, %v80
    %v91 = vmul.f32 %v81, %v81
    %v92 = vadd.f32 %v88, %v89
    %v93 = vadd.f32 %v92, %v90
    %v94 = vadd.f32 %v93, %v91
    %95 = vadd.xlane.f32.xlu0 %v94
    %v96 = vpop.xlane.xlu0 %95
    %v97 = vadd.f32 %v96, 1e-12
    %v98 = vrsqrt.pop %v97
    %v99 = vmul.f32 %v78, %v98
    %v100 = vmul.f32 %v79, %v98
    %v101 = vmul.f32 %v80, %v98
    %v102 = vmul.f32 %v81, %v98
    %v103 = vmul.f32 %v84, %v84
    %v104 = vmul.f32 %v85, %v85
    %v105 = vmul.f32 %v86, %v86
    %v106 = vmul.f32 %v87, %v87
    %v107 = vadd.f32 %v103, %v104
    %v108 = vadd.f32 %v107, %v105
    %v109 = vadd.f32 %v108, %v106
    %110 = vadd.xlane.f32.xlu0 %v109
    %v111 = vpop.xlane.xlu0 %110
    %v112 = vadd.f32 %v111, 1e-12
    %v113 = vrsqrt.pop %v112
    %v114 = vmul.f32 %v84, %v113
    %v115 = vmul.f32 %v85, %v113
    %v116 = vmul.f32 %v86, %v113
    %v117 = vmul.f32 %v87, %v113
    %v118 = vpack.c.bf16 %v99, %v99
    %v119 = vpack.c.bf16 %v100, %v100
    %v120 = vpack.c.bf16 %v101, %v101
    %v121 = vpack.c.bf16 %v102, %v102
    %v122 = vld [vmem:[#allocation3] sm:$0xff]
    %v123 = vld [vmem:[#allocation3 + $0x8] sm:$0xff]
    %v124 = vld [vmem:[#allocation3 + $0x10] sm:$0xff]
    %v125 = vld [vmem:[#allocation3 + $0x18] sm:$0xff]
    %v126 = vld [vmem:[#allocation3 + $0x20] sm:$0xff]
    %v127 = vld [vmem:[#allocation3 + $0x28] sm:$0xff]
    %v128 = vld [vmem:[#allocation3 + $0x30] sm:$0xff]
    %v129 = vld [vmem:[#allocation3 + $0x38] sm:$0xff]
    %v130 = vld [vmem:[#allocation3 + $0x40] sm:$0xff]
    %v131 = vld [vmem:[#allocation3 + $0x48] sm:$0xff]
    %v132 = vld [vmem:[#allocation3 + $0x50] sm:$0xff]
    %v133 = vld [vmem:[#allocation3 + $0x58] sm:$0xff]
    %v134 = vld [vmem:[#allocation3 + $0x60] sm:$0xff]
    %v135 = vld [vmem:[#allocation3 + $0x68] sm:$0xff]
    %v136 = vld [vmem:[#allocation3 + $0x70] sm:$0xff]
    %v137 = vld [vmem:[#allocation3 + $0x78] sm:$0xff]
    %v138 = vld [vmem:[#allocation3 + $0x80] sm:$0xff]
    %v139 = vld [vmem:[#allocation3 + $0x88] sm:$0xff]
    %v140 = vld [vmem:[#allocation3 + $0x90] sm:$0xff]
    %v141 = vld [vmem:[#allocation3 + $0x98] sm:$0xff]
    %v142 = vld [vmem:[#allocation3 + $0xa0] sm:$0xff]
    %v143 = vld [vmem:[#allocation3 + $0xa8] sm:$0xff]
    %v144 = vld [vmem:[#allocation3 + $0xb0] sm:$0xff]
    %v145 = vld [vmem:[#allocation3 + $0xb8] sm:$0xff]
    %v146 = vld [vmem:[#allocation3 + $0xc0] sm:$0xff]
    %v147 = vld [vmem:[#allocation3 + $0xc8] sm:$0xff]
    %v148 = vld [vmem:[#allocation3 + $0xd0] sm:$0xff]
    %v149 = vld [vmem:[#allocation3 + $0xd8] sm:$0xff]
    %v150 = vld [vmem:[#allocation3 + $0xe0] sm:$0xff]
    %v151 = vld [vmem:[#allocation3 + $0xe8] sm:$0xff]
    %v152 = vld [vmem:[#allocation3 + $0xf0] sm:$0xff]
    %v153 = vld [vmem:[#allocation3 + $0xf8] sm:$0xff]
    %v154 = vld [vmem:[#allocation3 + $0x100] sm:$0xff]
    %v155 = vld [vmem:[#allocation3 + $0x108] sm:$0xff]
    %v156 = vld [vmem:[#allocation3 + $0x110] sm:$0xff]
    %v157 = vld [vmem:[#allocation3 + $0x118] sm:$0xff]
    %v158 = vld [vmem:[#allocation3 + $0x120] sm:$0xff]
    %v159 = vld [vmem:[#allocation3 + $0x128] sm:$0xff]
    %v160 = vld [vmem:[#allocation3 + $0x130] sm:$0xff]
    %v161 = vld [vmem:[#allocation3 + $0x138] sm:$0xff]
    %v162 = vld [vmem:[#allocation3 + $0x140] sm:$0xff]
    %v163 = vld [vmem:[#allocation3 + $0x148] sm:$0xff]
    %v164 = vld [vmem:[#allocation3 + $0x150] sm:$0xff]
    %v165 = vld [vmem:[#allocation3 + $0x158] sm:$0xff]
    %v166 = vld [vmem:[#allocation3 + $0x160] sm:$0xff]
    %v167 = vld [vmem:[#allocation3 + $0x168] sm:$0xff]
    %v168 = vld [vmem:[#allocation3 + $0x170] sm:$0xff]
    %v169 = vld [vmem:[#allocation3 + $0x178] sm:$0xff]
    %v170 = vld [vmem:[#allocation3 + $0x180] sm:$0xff]
    %v171 = vld [vmem:[#allocation3 + $0x188] sm:$0xff]
    %v172 = vld [vmem:[#allocation3 + $0x190] sm:$0xff]
    %v173 = vld [vmem:[#allocation3 + $0x198] sm:$0xff]
    %v174 = vld [vmem:[#allocation3 + $0x1a0] sm:$0xff]
    %v175 = vld [vmem:[#allocation3 + $0x1a8] sm:$0xff]
    %v176 = vld [vmem:[#allocation3 + $0x1b0] sm:$0xff]
    %v177 = vld [vmem:[#allocation3 + $0x1b8] sm:$0xff]
    %v178 = vld [vmem:[#allocation3 + $0x1c0] sm:$0xff]
    %v179 = vld [vmem:[#allocation3 + $0x1c8] sm:$0xff]
    %v180 = vld [vmem:[#allocation3 + $0x1d0] sm:$0xff]
    %v181 = vld [vmem:[#allocation3 + $0x1d8] sm:$0xff]
    %v182 = vld [vmem:[#allocation3 + $0x1e0] sm:$0xff]
    %v183 = vld [vmem:[#allocation3 + $0x1e8] sm:$0xff]
    %v184 = vld [vmem:[#allocation3 + $0x1f0] sm:$0xff]
    %v185 = vld [vmem:[#allocation3 + $0x1f8] sm:$0xff]
    %v186 = vld [vmem:[#allocation3 + $0x200] sm:$0xff]
    %v187 = vld [vmem:[#allocation3 + $0x208] sm:$0xff]
    %v188 = vld [vmem:[#allocation3 + $0x210] sm:$0xff]
    %v189 = vld [vmem:[#allocation3 + $0x218] sm:$0xff]
    %v190 = vld [vmem:[#allocation3 + $0x220] sm:$0xff]
    %v191 = vld [vmem:[#allocation3 + $0x228] sm:$0xff]
    %v192 = vld [vmem:[#allocation3 + $0x230] sm:$0xff]
    %v193 = vld [vmem:[#allocation3 + $0x238] sm:$0xff]
    %v194 = vld [vmem:[#allocation3 + $0x240] sm:$0xff]
    %v195 = vld [vmem:[#allocation3 + $0x248] sm:$0xff]
    %v196 = vld [vmem:[#allocation3 + $0x250] sm:$0xff]
    %v197 = vld [vmem:[#allocation3 + $0x258] sm:$0xff]
    %v198 = vld [vmem:[#allocation3 + $0x260] sm:$0xff]
    %v199 = vld [vmem:[#allocation3 + $0x268] sm:$0xff]
    %v200 = vld [vmem:[#allocation3 + $0x270] sm:$0xff]
    %v201 = vld [vmem:[#allocation3 + $0x278] sm:$0xff]
    %v202 = vld [vmem:[#allocation3 + $0x280] sm:$0xff]
    %v203 = vld [vmem:[#allocation3 + $0x288] sm:$0xff]
    %v204 = vld [vmem:[#allocation3 + $0x290] sm:$0xff]
    %v205 = vld [vmem:[#allocation3 + $0x298] sm:$0xff]
    %v206 = vld [vmem:[#allocation3 + $0x2a0] sm:$0xff]
    %v207 = vld [vmem:[#allocation3 + $0x2a8] sm:$0xff]
    %v208 = vld [vmem:[#allocation3 + $0x2b0] sm:$0xff]
    %v209 = vld [vmem:[#allocation3 + $0x2b8] sm:$0xff]
    %v210 = vld [vmem:[#allocation3 + $0x2c0] sm:$0xff]
    %v211 = vld [vmem:[#allocation3 + $0x2c8] sm:$0xff]
    %v212 = vld [vmem:[#allocation3 + $0x2d0] sm:$0xff]
    %v213 = vld [vmem:[#allocation3 + $0x2d8] sm:$0xff]
    %v214 = vld [vmem:[#allocation3 + $0x2e0] sm:$0xff]
    %v215 = vld [vmem:[#allocation3 + $0x2e8] sm:$0xff]
    %v216 = vld [vmem:[#allocation3 + $0x2f0] sm:$0xff]
    %v217 = vld [vmem:[#allocation3 + $0x2f8] sm:$0xff]
    %v218 = vld [vmem:[#allocation3 + $0x300] sm:$0xff]
    %v219 = vld [vmem:[#allocation3 + $0x308] sm:$0xff]
    %v220 = vld [vmem:[#allocation3 + $0x310] sm:$0xff]
    %v221 = vld [vmem:[#allocation3 + $0x318] sm:$0xff]
    %v222 = vld [vmem:[#allocation3 + $0x320] sm:$0xff]
    %v223 = vld [vmem:[#allocation3 + $0x328] sm:$0xff]
    %v224 = vld [vmem:[#allocation3 + $0x330] sm:$0xff]
    %v225 = vld [vmem:[#allocation3 + $0x338] sm:$0xff]
    %v226 = vld [vmem:[#allocation3 + $0x340] sm:$0xff]
    %v227 = vld [vmem:[#allocation3 + $0x348] sm:$0xff]
    %v228 = vld [vmem:[#allocation3 + $0x350] sm:$0xff]
    %v229 = vld [vmem:[#allocation3 + $0x358] sm:$0xff]
    %v230 = vld [vmem:[#allocation3 + $0x360] sm:$0xff]
    %v231 = vld [vmem:[#allocation3 + $0x368] sm:$0xff]
    %v232 = vld [vmem:[#allocation3 + $0x370] sm:$0xff]
    %v233 = vld [vmem:[#allocation3 + $0x378] sm:$0xff]
    %v234 = vld [vmem:[#allocation3 + $0x380] sm:$0xff]
    %v235 = vld [vmem:[#allocation3 + $0x388] sm:$0xff]
    %v236 = vld [vmem:[#allocation3 + $0x390] sm:$0xff]
    %v237 = vld [vmem:[#allocation3 + $0x398] sm:$0xff]
    %v238 = vld [vmem:[#allocation3 + $0x3a0] sm:$0xff]
    %v239 = vld [vmem:[#allocation3 + $0x3a8] sm:$0xff]
    %v240 = vld [vmem:[#allocation3 + $0x3b0] sm:$0xff]
    %v241 = vld [vmem:[#allocation3 + $0x3b8] sm:$0xff]
    %v242 = vld [vmem:[#allocation3 + $0x3c0] sm:$0xff]
    %v243 = vld [vmem:[#allocation3 + $0x3c8] sm:$0xff]
    %v244 = vld [vmem:[#allocation3 + $0x3d0] sm:$0xff]
    %v245 = vld [vmem:[#allocation3 + $0x3d8] sm:$0xff]
    %v246 = vld [vmem:[#allocation3 + $0x3e0] sm:$0xff]
    %v247 = vld [vmem:[#allocation3 + $0x3e8] sm:$0xff]
    %v248 = vld [vmem:[#allocation3 + $0x3f0] sm:$0xff]
    %v249 = vld [vmem:[#allocation3 + $0x3f8] sm:$0xff]
    %v250 = vpack.c.bf16 %v114, %v114
    %v251 = vpack.c.bf16 %v115, %v115
    %v252 = vpack.c.bf16 %v116, %v116
    %v253 = vpack.c.bf16 %v117, %v117
    %v254 = vld [vmem:[#allocation6] sm:$0xff]
    %v255 = vld [vmem:[#allocation6 + $0x8] sm:$0xff]
    %v256 = vld [vmem:[#allocation6 + $0x10] sm:$0xff]
    %v257 = vld [vmem:[#allocation6 + $0x18] sm:$0xff]
    %v258 = vld [vmem:[#allocation6 + $0x20] sm:$0xff]
    %v259 = vld [vmem:[#allocation6 + $0x28] sm:$0xff]
    %v260 = vld [vmem:[#allocation6 + $0x30] sm:$0xff]
    %v261 = vld [vmem:[#allocation6 + $0x38] sm:$0xff]
    %v262 = vld [vmem:[#allocation6 + $0x40] sm:$0xff]
    %v263 = vld [vmem:[#allocation6 + $0x48] sm:$0xff]
    %v264 = vld [vmem:[#allocation6 + $0x50] sm:$0xff]
    %v265 = vld [vmem:[#allocation6 + $0x58] sm:$0xff]
    %v266 = vld [vmem:[#allocation6 + $0x60] sm:$0xff]
    %v267 = vld [vmem:[#allocation6 + $0x68] sm:$0xff]
    %v268 = vld [vmem:[#allocation6 + $0x70] sm:$0xff]
    %v269 = vld [vmem:[#allocation6 + $0x78] sm:$0xff]
    %v270 = vld [vmem:[#allocation6 + $0x80] sm:$0xff]
    %v271 = vld [vmem:[#allocation6 + $0x88] sm:$0xff]
    %v272 = vld [vmem:[#allocation6 + $0x90] sm:$0xff]
    %v273 = vld [vmem:[#allocation6 + $0x98] sm:$0xff]
    %v274 = vld [vmem:[#allocation6 + $0xa0] sm:$0xff]
    %v275 = vld [vmem:[#allocation6 + $0xa8] sm:$0xff]
    %v276 = vld [vmem:[#allocation6 + $0xb0] sm:$0xff]
    %v277 = vld [vmem:[#allocation6 + $0xb8] sm:$0xff]
    %v278 = vld [vmem:[#allocation6 + $0xc0] sm:$0xff]
    %v279 = vld [vmem:[#allocation6 + $0xc8] sm:$0xff]
    %v280 = vld [vmem:[#allocation6 + $0xd0] sm:$0xff]
    %v281 = vld [vmem:[#allocation6 + $0xd8] sm:$0xff]
    %v282 = vld [vmem:[#allocation6 + $0xe0] sm:$0xff]
    %v283 = vld [vmem:[#allocation6 + $0xe8] sm:$0xff]
    %v284 = vld [vmem:[#allocation6 + $0xf0] sm:$0xff]
    %v285 = vld [vmem:[#allocation6 + $0xf8] sm:$0xff]
    %v286 = vld [vmem:[#allocation6 + $0x100] sm:$0xff]
    %v287 = vld [vmem:[#allocation6 + $0x108] sm:$0xff]
    %v288 = vld [vmem:[#allocation6 + $0x110] sm:$0xff]
    %v289 = vld [vmem:[#allocation6 + $0x118] sm:$0xff]
    %v290 = vld [vmem:[#allocation6 + $0x120] sm:$0xff]
    %v291 = vld [vmem:[#allocation6 + $0x128] sm:$0xff]
    %v292 = vld [vmem:[#allocation6 + $0x130] sm:$0xff]
    %v293 = vld [vmem:[#allocation6 + $0x138] sm:$0xff]
    %v294 = vld [vmem:[#allocation6 + $0x140] sm:$0xff]
    %v295 = vld [vmem:[#allocation6 + $0x148] sm:$0xff]
    %v296 = vld [vmem:[#allocation6 + $0x150] sm:$0xff]
    %v297 = vld [vmem:[#allocation6 + $0x158] sm:$0xff]
    %v298 = vld [vmem:[#allocation6 + $0x160] sm:$0xff]
    %v299 = vld [vmem:[#allocation6 + $0x168] sm:$0xff]
    %v300 = vld [vmem:[#allocation6 + $0x170] sm:$0xff]
    %v301 = vld [vmem:[#allocation6 + $0x178] sm:$0xff]
    %v302 = vld [vmem:[#allocation6 + $0x180] sm:$0xff]
    %v303 = vld [vmem:[#allocation6 + $0x188] sm:$0xff]
    %v304 = vld [vmem:[#allocation6 + $0x190] sm:$0xff]
    %v305 = vld [vmem:[#allocation6 + $0x198] sm:$0xff]
    %v306 = vld [vmem:[#allocation6 + $0x1a0] sm:$0xff]
    %v307 = vld [vmem:[#allocation6 + $0x1a8] sm:$0xff]
    %v308 = vld [vmem:[#allocation6 + $0x1b0] sm:$0xff]
    %v309 = vld [vmem:[#allocation6 + $0x1b8] sm:$0xff]
    %v310 = vld [vmem:[#allocation6 + $0x1c0] sm:$0xff]
    %v311 = vld [vmem:[#allocation6 + $0x1c8] sm:$0xff]
    %v312 = vld [vmem:[#allocation6 + $0x1d0] sm:$0xff]
    %v313 = vld [vmem:[#allocation6 + $0x1d8] sm:$0xff]
    %v314 = vld [vmem:[#allocation6 + $0x1e0] sm:$0xff]
    %v315 = vld [vmem:[#allocation6 + $0x1e8] sm:$0xff]
    %v316 = vld [vmem:[#allocation6 + $0x1f0] sm:$0xff]
    %v317 = vld [vmem:[#allocation6 + $0x1f8] sm:$0xff]
    %v318 = vld [vmem:[#allocation6 + $0x200] sm:$0xff]
    %v319 = vld [vmem:[#allocation6 + $0x208] sm:$0xff]
    %v320 = vld [vmem:[#allocation6 + $0x210] sm:$0xff]
    %v321 = vld [vmem:[#allocation6 + $0x218] sm:$0xff]
    %v322 = vld [vmem:[#allocation6 + $0x220] sm:$0xff]
    %v323 = vld [vmem:[#allocation6 + $0x228] sm:$0xff]
    %v324 = vld [vmem:[#allocation6 + $0x230] sm:$0xff]
    %v325 = vld [vmem:[#allocation6 + $0x238] sm:$0xff]
    %v326 = vld [vmem:[#allocation6 + $0x240] sm:$0xff]
    %v327 = vld [vmem:[#allocation6 + $0x248] sm:$0xff]
    %v328 = vld [vmem:[#allocation6 + $0x250] sm:$0xff]
    %v329 = vld [vmem:[#allocation6 + $0x258] sm:$0xff]
    %v330 = vld [vmem:[#allocation6 + $0x260] sm:$0xff]
    %v331 = vld [vmem:[#allocation6 + $0x268] sm:$0xff]
    %v332 = vld [vmem:[#allocation6 + $0x270] sm:$0xff]
    %v333 = vld [vmem:[#allocation6 + $0x278] sm:$0xff]
    %v334 = vld [vmem:[#allocation6 + $0x280] sm:$0xff]
    %v335 = vld [vmem:[#allocation6 + $0x288] sm:$0xff]
    %v336 = vld [vmem:[#allocation6 + $0x290] sm:$0xff]
    %v337 = vld [vmem:[#allocation6 + $0x298] sm:$0xff]
    %v338 = vld [vmem:[#allocation6 + $0x2a0] sm:$0xff]
    %v339 = vld [vmem:[#allocation6 + $0x2a8] sm:$0xff]
    %v340 = vld [vmem:[#allocation6 + $0x2b0] sm:$0xff]
    %v341 = vld [vmem:[#allocation6 + $0x2b8] sm:$0xff]
    %v342 = vld [vmem:[#allocation6 + $0x2c0] sm:$0xff]
    %v343 = vld [vmem:[#allocation6 + $0x2c8] sm:$0xff]
    %v344 = vld [vmem:[#allocation6 + $0x2d0] sm:$0xff]
    %v345 = vld [vmem:[#allocation6 + $0x2d8] sm:$0xff]
    %v346 = vld [vmem:[#allocation6 + $0x2e0] sm:$0xff]
    %v347 = vld [vmem:[#allocation6 + $0x2e8] sm:$0xff]
    %v348 = vld [vmem:[#allocation6 + $0x2f0] sm:$0xff]
    %v349 = vld [vmem:[#allocation6 + $0x2f8] sm:$0xff]
    %v350 = vld [vmem:[#allocation6 + $0x300] sm:$0xff]
    %v351 = vld [vmem:[#allocation6 + $0x308] sm:$0xff]
    %v352 = vld [vmem:[#allocation6 + $0x310] sm:$0xff]
    %v353 = vld [vmem:[#allocation6 + $0x318] sm:$0xff]
    %v354 = vld [vmem:[#allocation6 + $0x320] sm:$0xff]
    %v355 = vld [vmem:[#allocation6 + $0x328] sm:$0xff]
    %v356 = vld [vmem:[#allocation6 + $0x330] sm:$0xff]
    %v357 = vld [vmem:[#allocation6 + $0x338] sm:$0xff]
    %v358 = vld [vmem:[#allocation6 + $0x340] sm:$0xff]
    %v359 = vld [vmem:[#allocation6 + $0x348] sm:$0xff]
    %v360 = vld [vmem:[#allocation6 + $0x350] sm:$0xff]
    %v361 = vld [vmem:[#allocation6 + $0x358] sm:$0xff]
    %v362 = vld [vmem:[#allocation6 + $0x360] sm:$0xff]
    %v363 = vld [vmem:[#allocation6 + $0x368] sm:$0xff]
    %v364 = vld [vmem:[#allocation6 + $0x370] sm:$0xff]
    %v365 = vld [vmem:[#allocation6 + $0x378] sm:$0xff]
    %v366 = vld [vmem:[#allocation6 + $0x380] sm:$0xff]
    %v367 = vld [vmem:[#allocation6 + $0x388] sm:$0xff]
    %v368 = vld [vmem:[#allocation6 + $0x390] sm:$0xff]
    %v369 = vld [vmem:[#allocation6 + $0x398] sm:$0xff]
    %v370 = vld [vmem:[#allocation6 + $0x3a0] sm:$0xff]
    %v371 = vld [vmem:[#allocation6 + $0x3a8] sm:$0xff]
    %v372 = vld [vmem:[#allocation6 + $0x3b0] sm:$0xff]
    %v373 = vld [vmem:[#allocation6 + $0x3b8] sm:$0xff]
    %v374 = vld [vmem:[#allocation6 + $0x3c0] sm:$0xff]
    %v375 = vld [vmem:[#allocation6 + $0x3c8] sm:$0xff]
    %v376 = vld [vmem:[#allocation6 + $0x3d0] sm:$0xff]
    %v377 = vld [vmem:[#allocation6 + $0x3d8] sm:$0xff]
    %v378 = vld [vmem:[#allocation6 + $0x3e0] sm:$0xff]
    %v379 = vld [vmem:[#allocation6 + $0x3e8] sm:$0xff]
    %v380 = vld [vmem:[#allocation6 + $0x3f0] sm:$0xff]
    %v381 = vld [vmem:[#allocation6 + $0x3f8] sm:$0xff]
    %v510 = vunpack.c.l.b16 %v254
    %v511 = vunpack.c.h.b16 %v254
    %v512 = vunpack.c.l.b16 %v255
    %v513 = vunpack.c.h.b16 %v255
    %v514 = vunpack.c.l.b16 %v256
    %v515 = vunpack.c.h.b16 %v256
    %v516 = vunpack.c.l.b16 %v257
    %v517 = vunpack.c.h.b16 %v257
    %v518 = vunpack.c.l.b16 %v258
    %v519 = vunpack.c.h.b16 %v258
    %v520 = vunpack.c.l.b16 %v259
    %v521 = vunpack.c.h.b16 %v259
    %v522 = vunpack.c.l.b16 %v260
    %v523 = vunpack.c.h.b16 %v260
    %v524 = vunpack.c.l.b16 %v261
    %v525 = vunpack.c.h.b16 %v261
    %v526 = vunpack.c.l.b16 %v262
    %v527 = vunpack.c.h.b16 %v262
    %v528 = vunpack.c.l.b16 %v263
    %v529 = vunpack.c.h.b16 %v263
    %v530 = vunpack.c.l.b16 %v264
    %v531 = vunpack.c.h.b16 %v264
    %v532 = vunpack.c.l.b16 %v265
    %v533 = vunpack.c.h.b16 %v265
    %v534 = vunpack.c.l.b16 %v266
    %v535 = vunpack.c.h.b16 %v266
    %v536 = vunpack.c.l.b16 %v267
    %v537 = vunpack.c.h.b16 %v267
    %v538 = vunpack.c.l.b16 %v268
    %v539 = vunpack.c.h.b16 %v268
    %v540 = vunpack.c.l.b16 %v269
    %v541 = vunpack.c.h.b16 %v269
    %v542 = vunpack.c.l.b16 %v270
    %v543 = vunpack.c.h.b16 %v270
    %v544 = vunpack.c.l.b16 %v271
    %v545 = vunpack.c.h.b16 %v271
    %v546 = vunpack.c.l.b16 %v272
    %v547 = vunpack.c.h.b16 %v272
    %v548 = vunpack.c.l.b16 %v273
    %v549 = vunpack.c.h.b16 %v273
    %v550 = vunpack.c.l.b16 %v274
    %v551 = vunpack.c.h.b16 %v274
    %v552 = vunpack.c.l.b16 %v275
    %v553 = vunpack.c.h.b16 %v275
    %v554 = vunpack.c.l.b16 %v276
    %v555 = vunpack.c.h.b16 %v276
    %v556 = vunpack.c.l.b16 %v277
    %v557 = vunpack.c.h.b16 %v277
    %v558 = vunpack.c.l.b16 %v278
    %v559 = vunpack.c.h.b16 %v278
    %v560 = vunpack.c.l.b16 %v279
    %v561 = vunpack.c.h.b16 %v279
    %v562 = vunpack.c.l.b16 %v280
    %v563 = vunpack.c.h.b16 %v280
    %v564 = vunpack.c.l.b16 %v281
    %v565 = vunpack.c.h.b16 %v281
    %v566 = vunpack.c.l.b16 %v282
    %v567 = vunpack.c.h.b16 %v282
    %v568 = vunpack.c.l.b16 %v283
    %v569 = vunpack.c.h.b16 %v283
    %v570 = vunpack.c.l.b16 %v284
    %v571 = vunpack.c.h.b16 %v284
    %v572 = vunpack.c.l.b16 %v285
    %v573 = vunpack.c.h.b16 %v285
    %v574 = vunpack.c.l.b16 %v286
    %v575 = vunpack.c.h.b16 %v286
    %v576 = vunpack.c.l.b16 %v287
    %v577 = vunpack.c.h.b16 %v287
    %v578 = vunpack.c.l.b16 %v288
    %v579 = vunpack.c.h.b16 %v288
    %v580 = vunpack.c.l.b16 %v289
    %v581 = vunpack.c.h.b16 %v289
    %v582 = vunpack.c.l.b16 %v290
    %v583 = vunpack.c.h.b16 %v290
    %v584 = vunpack.c.l.b16 %v291
    %v585 = vunpack.c.h.b16 %v291
    %v586 = vunpack.c.l.b16 %v292
    %v587 = vunpack.c.h.b16 %v292
    %v588 = vunpack.c.l.b16 %v293
    %v589 = vunpack.c.h.b16 %v293
    %v590 = vunpack.c.l.b16 %v294
    %v591 = vunpack.c.h.b16 %v294
    %v592 = vunpack.c.l.b16 %v295
    %v593 = vunpack.c.h.b16 %v295
    %v594 = vunpack.c.l.b16 %v296
    %v595 = vunpack.c.h.b16 %v296
    %v596 = vunpack.c.l.b16 %v297
    %v597 = vunpack.c.h.b16 %v297
    %v598 = vunpack.c.l.b16 %v298
    %v599 = vunpack.c.h.b16 %v298
    %v600 = vunpack.c.l.b16 %v299
    %v601 = vunpack.c.h.b16 %v299
    %v602 = vunpack.c.l.b16 %v300
    %v603 = vunpack.c.h.b16 %v300
    %v604 = vunpack.c.l.b16 %v301
    %v605 = vunpack.c.h.b16 %v301
    %v606 = vunpack.c.l.b16 %v302
    %v607 = vunpack.c.h.b16 %v302
    %v608 = vunpack.c.l.b16 %v303
    %v609 = vunpack.c.h.b16 %v303
    %v610 = vunpack.c.l.b16 %v304
    %v611 = vunpack.c.h.b16 %v304
    %v612 = vunpack.c.l.b16 %v305
    %v613 = vunpack.c.h.b16 %v305
    %v614 = vunpack.c.l.b16 %v306
    %v615 = vunpack.c.h.b16 %v306
    %v616 = vunpack.c.l.b16 %v307
    %v617 = vunpack.c.h.b16 %v307
    %v618 = vunpack.c.l.b16 %v308
    %v619 = vunpack.c.h.b16 %v308
    %v620 = vunpack.c.l.b16 %v309
    %v621 = vunpack.c.h.b16 %v309
    %v622 = vunpack.c.l.b16 %v310
    %v623 = vunpack.c.h.b16 %v310
    %v624 = vunpack.c.l.b16 %v311
    %v625 = vunpack.c.h.b16 %v311
    %v626 = vunpack.c.l.b16 %v312
    %v627 = vunpack.c.h.b16 %v312
    %v628 = vunpack.c.l.b16 %v313
    %v629 = vunpack.c.h.b16 %v313
    %v630 = vunpack.c.l.b16 %v314
    %v631 = vunpack.c.h.b16 %v314
    %v632 = vunpack.c.l.b16 %v315
    %v633 = vunpack.c.h.b16 %v315
    %v634 = vunpack.c.l.b16 %v316
    %v635 = vunpack.c.h.b16 %v316
    %v636 = vunpack.c.l.b16 %v317
    %v637 = vunpack.c.h.b16 %v317
    %v638 = vunpack.c.l.b16 %v318
    %v639 = vunpack.c.h.b16 %v318
    %v640 = vunpack.c.l.b16 %v319
    %v641 = vunpack.c.h.b16 %v319
    %v642 = vunpack.c.l.b16 %v320
    %v643 = vunpack.c.h.b16 %v320
    %v644 = vunpack.c.l.b16 %v321
    %v645 = vunpack.c.h.b16 %v321
    %v646 = vunpack.c.l.b16 %v322
    %v647 = vunpack.c.h.b16 %v322
    %v648 = vunpack.c.l.b16 %v323
    %v649 = vunpack.c.h.b16 %v323
    %v650 = vunpack.c.l.b16 %v324
    %v651 = vunpack.c.h.b16 %v324
    %v652 = vunpack.c.l.b16 %v325
    %v653 = vunpack.c.h.b16 %v325
    %v654 = vunpack.c.l.b16 %v326
    %v655 = vunpack.c.h.b16 %v326
    %v656 = vunpack.c.l.b16 %v327
    %v657 = vunpack.c.h.b16 %v327
    %v658 = vunpack.c.l.b16 %v328
    %v659 = vunpack.c.h.b16 %v328
    %v660 = vunpack.c.l.b16 %v329
    %v661 = vunpack.c.h.b16 %v329
    %v662 = vunpack.c.l.b16 %v330
    %v663 = vunpack.c.h.b16 %v330
    %v664 = vunpack.c.l.b16 %v331
    %v665 = vunpack.c.h.b16 %v331
    %v666 = vunpack.c.l.b16 %v332
    %v667 = vunpack.c.h.b16 %v332
    %v668 = vunpack.c.l.b16 %v333
    %v669 = vunpack.c.h.b16 %v333
    %v670 = vunpack.c.l.b16 %v334
    %v671 = vunpack.c.h.b16 %v334
    %v672 = vunpack.c.l.b16 %v335
    %v673 = vunpack.c.h.b16 %v335
    %v674 = vunpack.c.l.b16 %v336
    %v675 = vunpack.c.h.b16 %v336
    %v676 = vunpack.c.l.b16 %v337
    %v677 = vunpack.c.h.b16 %v337
    %v678 = vunpack.c.l.b16 %v338
    %v679 = vunpack.c.h.b16 %v338
    %v680 = vunpack.c.l.b16 %v339
    %v681 = vunpack.c.h.b16 %v339
    %v682 = vunpack.c.l.b16 %v340
    %v683 = vunpack.c.h.b16 %v340
    %v684 = vunpack.c.l.b16 %v341
    %v685 = vunpack.c.h.b16 %v341
    %v686 = vunpack.c.l.b16 %v342
    %v687 = vunpack.c.h.b16 %v342
    %v688 = vunpack.c.l.b16 %v343
    %v689 = vunpack.c.h.b16 %v343
    %v690 = vunpack.c.l.b16 %v344
    %v691 = vunpack.c.h.b16 %v344
    %v692 = vunpack.c.l.b16 %v345
    %v693 = vunpack.c.h.b16 %v345
    %v694 = vunpack.c.l.b16 %v346
    %v695 = vunpack.c.h.b16 %v346
    %v696 = vunpack.c.l.b16 %v347
    %v697 = vunpack.c.h.b16 %v347
    %v698 = vunpack.c.l.b16 %v348
    %v699 = vunpack.c.h.b16 %v348
    %v700 = vunpack.c.l.b16 %v349
    %v701 = vunpack.c.h.b16 %v349
    %v702 = vunpack.c.l.b16 %v350
    %v703 = vunpack.c.h.b16 %v350
    %v704 = vunpack.c.l.b16 %v351
    %v705 = vunpack.c.h.b16 %v351
    %v706 = vunpack.c.l.b16 %v352
    %v707 = vunpack.c.h.b16 %v352
    %v708 = vunpack.c.l.b16 %v353
    %v709 = vunpack.c.h.b16 %v353
    %v710 = vunpack.c.l.b16 %v354
    %v711 = vunpack.c.h.b16 %v354
    %v712 = vunpack.c.l.b16 %v355
    %v713 = vunpack.c.h.b16 %v355
    %v714 = vunpack.c.l.b16 %v356
    %v715 = vunpack.c.h.b16 %v356
    %v716 = vunpack.c.l.b16 %v357
    %v717 = vunpack.c.h.b16 %v357
    %v718 = vunpack.c.l.b16 %v358
    %v719 = vunpack.c.h.b16 %v358
    %v720 = vunpack.c.l.b16 %v359
    %v721 = vunpack.c.h.b16 %v359
    %v722 = vunpack.c.l.b16 %v360
    %v723 = vunpack.c.h.b16 %v360
    %v724 = vunpack.c.l.b16 %v361
    %v725 = vunpack.c.h.b16 %v361
    %v726 = vunpack.c.l.b16 %v362
    %v727 = vunpack.c.h.b16 %v362
    %v728 = vunpack.c.l.b16 %v363
    %v729 = vunpack.c.h.b16 %v363
    %v730 = vunpack.c.l.b16 %v364
    %v731 = vunpack.c.h.b16 %v364
    %v732 = vunpack.c.l.b16 %v365
    %v733 = vunpack.c.h.b16 %v365
    %v734 = vunpack.c.l.b16 %v366
    %v735 = vunpack.c.h.b16 %v366
    %v736 = vunpack.c.l.b16 %v367
    %v737 = vunpack.c.h.b16 %v367
    %v738 = vunpack.c.l.b16 %v368
    %v739 = vunpack.c.h.b16 %v368
    %v740 = vunpack.c.l.b16 %v369
    %v741 = vunpack.c.h.b16 %v369
    %v742 = vunpack.c.l.b16 %v370
    %v743 = vunpack.c.h.b16 %v370
    %v744 = vunpack.c.l.b16 %v371
    %v745 = vunpack.c.h.b16 %v371
    %v746 = vunpack.c.l.b16 %v372
    %v747 = vunpack.c.h.b16 %v372
    %v748 = vunpack.c.l.b16 %v373
    %v749 = vunpack.c.h.b16 %v373
    %v750 = vunpack.c.l.b16 %v374
    %v751 = vunpack.c.h.b16 %v374
    %v752 = vunpack.c.l.b16 %v375
    %v753 = vunpack.c.h.b16 %v375
    %v754 = vunpack.c.l.b16 %v376
    %v755 = vunpack.c.h.b16 %v376
    %v756 = vunpack.c.l.b16 %v377
    %v757 = vunpack.c.h.b16 %v377
    %v758 = vunpack.c.l.b16 %v378
    %v759 = vunpack.c.h.b16 %v378
    %v760 = vunpack.c.l.b16 %v379
    %v761 = vunpack.c.h.b16 %v379
    %v762 = vunpack.c.l.b16 %v380
    %v763 = vunpack.c.h.b16 %v380
    %v764 = vunpack.c.l.b16 %v381
    %v765 = vunpack.c.h.b16 %v381
    %v766 = vpack.c.b16 %v514, %v510
    %v767 = vpack.c.b16 %v515, %v511
    %v768 = vpack.c.b16 %v516, %v512
    %v769 = vpack.c.b16 %v517, %v513
    %v770 = vpack.c.b16 %v522, %v518
    %v771 = vpack.c.b16 %v523, %v519
    %v772 = vpack.c.b16 %v524, %v520
    %v773 = vpack.c.b16 %v525, %v521
    %v774 = vpack.c.b16 %v530, %v526
    %v775 = vpack.c.b16 %v531, %v527
    %v776 = vpack.c.b16 %v532, %v528
    %v777 = vpack.c.b16 %v533, %v529
    %v778 = vpack.c.b16 %v538, %v534
    %v779 = vpack.c.b16 %v539, %v535
    %v780 = vpack.c.b16 %v540, %v536
    %v781 = vpack.c.b16 %v541, %v537
    %v782 = vpack.c.b16 %v546, %v542
    %v783 = vpack.c.b16 %v547, %v543
    %v784 = vpack.c.b16 %v548, %v544
    %v785 = vpack.c.b16 %v549, %v545
    %v786 = vpack.c.b16 %v554, %v550
    %v787 = vpack.c.b16 %v555, %v551
    %v788 = vpack.c.b16 %v556, %v552
    %v789 = vpack.c.b16 %v557, %v553
    %v790 = vpack.c.b16 %v562, %v558
    %v791 = vpack.c.b16 %v563, %v559
    %v792 = vpack.c.b16 %v564, %v560
    %v793 = vpack.c.b16 %v565, %v561
    %v794 = vpack.c.b16 %v570, %v566
    %v795 = vpack.c.b16 %v571, %v567
    %v796 = vpack.c.b16 %v572, %v568
    %v797 = vpack.c.b16 %v573, %v569
    %v798 = vpack.c.b16 %v578, %v574
    %v799 = vpack.c.b16 %v579, %v575
    %v800 = vpack.c.b16 %v580, %v576
    %v801 = vpack.c.b16 %v581, %v577
    %v802 = vpack.c.b16 %v586, %v582
    %v803 = vpack.c.b16 %v587, %v583
    %v804 = vpack.c.b16 %v588, %v584
    %v805 = vpack.c.b16 %v589, %v585
    %v806 = vpack.c.b16 %v594, %v590
    %v807 = vpack.c.b16 %v595, %v591
    %v808 = vpack.c.b16 %v596, %v592
    %v809 = vpack.c.b16 %v597, %v593
    %v810 = vpack.c.b16 %v602, %v598
    %v811 = vpack.c.b16 %v603, %v599
    %v812 = vpack.c.b16 %v604, %v600
    %v813 = vpack.c.b16 %v605, %v601
    %v814 = vpack.c.b16 %v610, %v606
    %v815 = vpack.c.b16 %v611, %v607
    %v816 = vpack.c.b16 %v612, %v608
    %v817 = vpack.c.b16 %v613, %v609
    %v818 = vpack.c.b16 %v618, %v614
    %v819 = vpack.c.b16 %v619, %v615
    %v820 = vpack.c.b16 %v620, %v616
    %v821 = vpack.c.b16 %v621, %v617
    %v822 = vpack.c.b16 %v626, %v622
    %v823 = vpack.c.b16 %v627, %v623
    %v824 = vpack.c.b16 %v628, %v624
    %v825 = vpack.c.b16 %v629, %v625
    %v826 = vpack.c.b16 %v634, %v630
    %v827 = vpack.c.b16 %v635, %v631
    %v828 = vpack.c.b16 %v636, %v632
    %v829 = vpack.c.b16 %v637, %v633
    %v830 = vpack.c.b16 %v642, %v638
    %v831 = vpack.c.b16 %v643, %v639
    %v832 = vpack.c.b16 %v644, %v640
    %v833 = vpack.c.b16 %v645, %v641
    %v834 = vpack.c.b16 %v650, %v646
    %v835 = vpack.c.b16 %v651, %v647
    %v836 = vpack.c.b16 %v652, %v648
    %v837 = vpack.c.b16 %v653, %v649
    %v838 = vpack.c.b16 %v658, %v654
    %v839 = vpack.c.b16 %v659, %v655
    %v840 = vpack.c.b16 %v660, %v656
    %v841 = vpack.c.b16 %v661, %v657
    %v842 = vpack.c.b16 %v666, %v662
    %v843 = vpack.c.b16 %v667, %v663
    %v844 = vpack.c.b16 %v668, %v664
    %v845 = vpack.c.b16 %v669, %v665
    %v846 = vpack.c.b16 %v674, %v670
    %v847 = vpack.c.b16 %v675, %v671
    %v848 = vpack.c.b16 %v676, %v672
    %v849 = vpack.c.b16 %v677, %v673
    %v850 = vpack.c.b16 %v682, %v678
    %v851 = vpack.c.b16 %v683, %v679
    %v852 = vpack.c.b16 %v684, %v680
    %v853 = vpack.c.b16 %v685, %v681
    %v854 = vpack.c.b16 %v690, %v686
    %v855 = vpack.c.b16 %v691, %v687
    %v856 = vpack.c.b16 %v692, %v688
    %v857 = vpack.c.b16 %v693, %v689
    %v858 = vpack.c.b16 %v698, %v694
    %v859 = vpack.c.b16 %v699, %v695
    %v860 = vpack.c.b16 %v700, %v696
    %v861 = vpack.c.b16 %v701, %v697
    %v862 = vpack.c.b16 %v706, %v702
    %v863 = vpack.c.b16 %v707, %v703
    %v864 = vpack.c.b16 %v708, %v704
    %v865 = vpack.c.b16 %v709, %v705
    %v866 = vpack.c.b16 %v714, %v710
    %v867 = vpack.c.b16 %v715, %v711
    %v868 = vpack.c.b16 %v716, %v712
    %v869 = vpack.c.b16 %v717, %v713
    %v870 = vpack.c.b16 %v722, %v718
    %v871 = vpack.c.b16 %v723, %v719
    %v872 = vpack.c.b16 %v724, %v720
    %v873 = vpack.c.b16 %v725, %v721
    %v874 = vpack.c.b16 %v730, %v726
    %v875 = vpack.c.b16 %v731, %v727
    %v876 = vpack.c.b16 %v732, %v728
    %v877 = vpack.c.b16 %v733, %v729
    %v878 = vpack.c.b16 %v738, %v734
    %v879 = vpack.c.b16 %v739, %v735
    %v880 = vpack.c.b16 %v740, %v736
    %v881 = vpack.c.b16 %v741, %v737
    %v882 = vpack.c.b16 %v746, %v742
    %v883 = vpack.c.b16 %v747, %v743
    %v884 = vpack.c.b16 %v748, %v744
    %v885 = vpack.c.b16 %v749, %v745
    %v886 = vpack.c.b16 %v754, %v750
    %v887 = vpack.c.b16 %v755, %v751
    %v888 = vpack.c.b16 %v756, %v752
    %v889 = vpack.c.b16 %v757, %v753
    %v890 = vpack.c.b16 %v762, %v758
    %v891 = vpack.c.b16 %v763, %v759
    %v892 = vpack.c.b16 %v764, %v760
    %v893 = vpack.c.b16 %v765, %v761
    %1022 = vmatprep.subr.bf16.mxu0 %v795
    %1023 = vmatpush1.bf16.msra.mxu0 %v794
    %1024 = vmatprep.subr.bf16.mxu0 %v791
    %1025 = vmatpush1.bf16.msra.mxu0 %v790
    %1026 = vmatprep.subr.bf16.mxu0 %v787
    %1027 = vmatpush1.bf16.msra.mxu0 %v786
    %1028 = vmatprep.subr.bf16.mxu0 %v783
    %1029 = vmatpush1.bf16.msra.mxu0 %v782
    %1030 = vmatprep.subr.bf16.mxu0 %v779
    %1031 = vmatpush1.bf16.msra.mxu0 %v778
    %1032 = vmatprep.subr.bf16.mxu0 %v775
    %1033 = vmatpush1.bf16.msra.mxu0 %v774
    %1034 = vmatprep.subr.bf16.mxu0 %v771
    %1035 = vmatpush1.bf16.msra.mxu0 %v770
    %1036 = vmatprep.subr.bf16.mxu0 %v767
    %1037 = vmatpush1.bf16.msra.mxu0 %v766
    %1038 = vmatprep.subr.bf16.mxu0 %v827
    %1039 = vmatpush2.bf16.msra.mxu0 %v826
    %1040 = vmatprep.subr.bf16.mxu0 %v823
    %1041 = vmatpush2.bf16.msra.mxu0 %v822
    %1042 = vmatprep.subr.bf16.mxu0 %v819
    %1043 = vmatpush2.bf16.msra.mxu0 %v818
    %1044 = vmatprep.subr.bf16.mxu0 %v815
    %1045 = vmatpush2.bf16.msra.mxu0 %v814
    %1046 = vmatprep.subr.bf16.mxu0 %v811
    %1047 = vmatpush2.bf16.msra.mxu0 %v810
    %1048 = vmatprep.subr.bf16.mxu0 %v807
    %1049 = vmatpush2.bf16.msra.mxu0 %v806
    %1050 = vmatprep.subr.bf16.mxu0 %v803
    %1051 = vmatpush2.bf16.msra.mxu0 %v802
    %1052 = vmatprep.subr.bf16.mxu0 %v799
    %1053 = vmatpush2.bf16.msra.mxu0 %v798
    %1054 = vmatprep.mubr.bf16.mxu0 %v251
    %1055 = vmatmul.mubr.bf16.gmra.mxu0 %v250
    %v1056 = vpop.f32.mrf.mxu0
    %v1057 = vadd.f32 0.0, %v1056
    %v1058 = vpop.f32.mrf.mxu0
    %v1059 = vadd.f32 0.0, %v1058
    %v1060 = vpop.f32.mrf.mxu0
    %v1061 = vpop.f32.mrf.mxu0
    %1062 = vdwg.mxu0
    %1063 = vmatprep.subr.bf16.mxu0 %v859
    %1064 = vmatpush1.bf16.msra.mxu0 %v858
    %1065 = vmatprep.subr.bf16.mxu0 %v855
    %1066 = vmatpush1.bf16.msra.mxu0 %v854
    %1067 = vmatprep.subr.bf16.mxu0 %v851
    %1068 = vmatpush1.bf16.msra.mxu0 %v850
    %1069 = vmatprep.subr.bf16.mxu0 %v847
    %1070 = vmatpush1.bf16.msra.mxu0 %v846
    %1071 = vmatprep.subr.bf16.mxu0 %v843
    %1072 = vmatpush1.bf16.msra.mxu0 %v842
    %1073 = vmatprep.subr.bf16.mxu0 %v839
    %1074 = vmatpush1.bf16.msra.mxu0 %v838
    %1075 = vmatprep.subr.bf16.mxu0 %v835
    %1076 = vmatpush1.bf16.msra.mxu0 %v834
    %1077 = vmatprep.subr.bf16.mxu0 %v831
    %1078 = vmatpush1.bf16.msra.mxu0 %v830
    %1079 = vmatprep.subr.bf16.mxu0 %v891
    %1080 = vmatpush2.bf16.msra.mxu0 %v890
    %1081 = vmatprep.subr.bf16.mxu0 %v887
    %1082 = vmatpush2.bf16.msra.mxu0 %v886
    %1083 = vmatprep.subr.bf16.mxu0 %v883
    %1084 = vmatpush2.bf16.msra.mxu0 %v882
    %1085 = vmatprep.subr.bf16.mxu0 %v879
    %1086 = vmatpush2.bf16.msra.mxu0 %v878
    %1087 = vmatprep.subr.bf16.mxu0 %v875
    %1088 = vmatpush2.bf16.msra.mxu0 %v874
    %1089 = vmatprep.subr.bf16.mxu0 %v871
    %1090 = vmatpush2.bf16.msra.mxu0 %v870
    %1091 = vmatprep.subr.bf16.mxu0 %v867
    %1092 = vmatpush2.bf16.msra.mxu0 %v866
    %1093 = vmatprep.subr.bf16.mxu0 %v863
    %1094 = vmatpush2.bf16.msra.mxu0 %v862
    %1095 = vmatprep.mubr.bf16.mxu0 %v253
    %1096 = vmatmul.mubr.bf16.gmra.mxu0 %v252
    %v1097 = vpop.f32.mrf.mxu0
    %v1098 = vadd.f32 %v1057, %v1097
    %v1099 = vpop.f32.mrf.mxu0
    %v1100 = vadd.f32 %v1059, %v1099
    %v1101 = vpop.f32.mrf.mxu0
    %v1102 = vpop.f32.mrf.mxu0
    %1103 = vdwg.mxu0
    %1104 = vmatprep.subr.bf16.mxu0 %v797
    %1105 = vmatpush1.bf16.msra.mxu0 %v796
    %1106 = vmatprep.subr.bf16.mxu0 %v793
    %1107 = vmatpush1.bf16.msra.mxu0 %v792
    %1108 = vmatprep.subr.bf16.mxu0 %v789
    %1109 = vmatpush1.bf16.msra.mxu0 %v788
    %1110 = vmatprep.subr.bf16.mxu0 %v785
    %1111 = vmatpush1.bf16.msra.mxu0 %v784
    %1112 = vmatprep.subr.bf16.mxu0 %v781
    %1113 = vmatpush1.bf16.msra.mxu0 %v780
    %1114 = vmatprep.subr.bf16.mxu0 %v777
    %1115 = vmatpush1.bf16.msra.mxu0 %v776
    %1116 = vmatprep.subr.bf16.mxu0 %v773
    %1117 = vmatpush1.bf16.msra.mxu0 %v772
    %1118 = vmatprep.subr.bf16.mxu0 %v769
    %1119 = vmatpush1.bf16.msra.mxu0 %v768
    %1120 = vmatprep.subr.bf16.mxu0 %v829
    %1121 = vmatpush2.bf16.msra.mxu0 %v828
    %1122 = vmatprep.subr.bf16.mxu0 %v825
    %1123 = vmatpush2.bf16.msra.mxu0 %v824
    %1124 = vmatprep.subr.bf16.mxu0 %v821
    %1125 = vmatpush2.bf16.msra.mxu0 %v820
    %1126 = vmatprep.subr.bf16.mxu0 %v817
    %1127 = vmatpush2.bf16.msra.mxu0 %v816
    %1128 = vmatprep.subr.bf16.mxu0 %v813
    %1129 = vmatpush2.bf16.msra.mxu0 %v812
    %1130 = vmatprep.subr.bf16.mxu0 %v809
    %1131 = vmatpush2.bf16.msra.mxu0 %v808
    %1132 = vmatprep.subr.bf16.mxu0 %v805
    %1133 = vmatpush2.bf16.msra.mxu0 %v804
    %1134 = vmatprep.subr.bf16.mxu0 %v801
    %1135 = vmatpush2.bf16.msra.mxu0 %v800
    %1136 = vmatprep.mubr.bf16.mxu0 %v251
    %1137 = vmatmul.mubr.bf16.gmra.mxu0 %v250
    %v1138 = vpop.f32.mrf.mxu0
    %v1139 = vadd.f32 0.0, %v1138
    %v1140 = vpop.f32.mrf.mxu0
    %v1141 = vadd.f32 0.0, %v1140
    %v1142 = vpop.f32.mrf.mxu0
    %v1143 = vpop.f32.mrf.mxu0
    %1144 = vdwg.mxu0
    %1145 = vmatprep.subr.bf16.mxu0 %v861
    %1146 = vmatpush1.bf16.msra.mxu0 %v860
    %1147 = vmatprep.subr.bf16.mxu0 %v857
    %1148 = vmatpush1.bf16.msra.mxu0 %v856
    %1149 = vmatprep.subr.bf16.mxu0 %v853
    %1150 = vmatpush1.bf16.msra.mxu0 %v852
    %1151 = vmatprep.subr.bf16.mxu0 %v849
    %1152 = vmatpush1.bf16.msra.mxu0 %v848
    %1153 = vmatprep.subr.bf16.mxu0 %v845
    %1154 = vmatpush1.bf16.msra.mxu0 %v844
    %1155 = vmatprep.subr.bf16.mxu0 %v841
    %1156 = vmatpush1.bf16.msra.mxu0 %v840
    %1157 = vmatprep.subr.bf16.mxu0 %v837
    %1158 = vmatpush1.bf16.msra.mxu0 %v836
    %1159 = vmatprep.subr.bf16.mxu0 %v833
    %1160 = vmatpush1.bf16.msra.mxu0 %v832
    %1161 = vmatprep.subr.bf16.mxu0 %v893
    %1162 = vmatpush2.bf16.msra.mxu0 %v892
    %1163 = vmatprep.subr.bf16.mxu0 %v889
    %1164 = vmatpush2.bf16.msra.mxu0 %v888
    %1165 = vmatprep.subr.bf16.mxu0 %v885
    %1166 = vmatpush2.bf16.msra.mxu0 %v884
    %1167 = vmatprep.subr.bf16.mxu0 %v881
    %1168 = vmatpush2.bf16.msra.mxu0 %v880
    %1169 = vmatprep.subr.bf16.mxu0 %v877
    %1170 = vmatpush2.bf16.msra.mxu0 %v876
    %1171 = vmatprep.subr.bf16.mxu0 %v873
    %1172 = vmatpush2.bf16.msra.mxu0 %v872
    %1173 = vmatprep.subr.bf16.mxu0 %v869
    %1174 = vmatpush2.bf16.msra.mxu0 %v868
    %1175 = vmatprep.subr.bf16.mxu0 %v865
    %1176 = vmatpush2.bf16.msra.mxu0 %v864
    %1177 = vmatprep.mubr.bf16.mxu0 %v253
    %1178 = vmatmul.mubr.bf16.gmra.mxu0 %v252
    %v1179 = vpop.f32.mrf.mxu0
    %v1180 = vadd.f32 %v1139, %v1179
    %v1181 = vpop.f32.mrf.mxu0
    %v1182 = vadd.f32 %v1141, %v1181
    %v1183 = vpop.f32.mrf.mxu0
    %v1184 = vpop.f32.mrf.mxu0
    %1185 = vdwg.mxu0
    %v1314 = vunpack.c.l.b16 %v122
    %v1315 = vunpack.c.h.b16 %v122
    %v1316 = vunpack.c.l.b16 %v123
    %v1317 = vunpack.c.h.b16 %v123
    %v1318 = vunpack.c.l.b16 %v124
    %v1319 = vunpack.c.h.b16 %v124
    %v1320 = vunpack.c.l.b16 %v125
    %v1321 = vunpack.c.h.b16 %v125
    %v1322 = vunpack.c.l.b16 %v126
    %v1323 = vunpack.c.h.b16 %v126
    %v1324 = vunpack.c.l.b16 %v127
    %v1325 = vunpack.c.h.b16 %v127
    %v1326 = vunpack.c.l.b16 %v128
    %v1327 = vunpack.c.h.b16 %v128
    %v1328 = vunpack.c.l.b16 %v129
    %v1329 = vunpack.c.h.b16 %v129
    %v1330 = vunpack.c.l.b16 %v130
    %v1331 = vunpack.c.h.b16 %v130
    %v1332 = vunpack.c.l.b16 %v131
    %v1333 = vunpack.c.h.b16 %v131
    %v1334 = vunpack.c.l.b16 %v132
    %v1335 = vunpack.c.h.b16 %v132
    %v1336 = vunpack.c.l.b16 %v133
    %v1337 = vunpack.c.h.b16 %v133
    %v1338 = vunpack.c.l.b16 %v134
    %v1339 = vunpack.c.h.b16 %v134
    %v1340 = vunpack.c.l.b16 %v135
    %v1341 = vunpack.c.h.b16 %v135
    %v1342 = vunpack.c.l.b16 %v136
    %v1343 = vunpack.c.h.b16 %v136
    %v1344 = vunpack.c.l.b16 %v137
    %v1345 = vunpack.c.h.b16 %v137
    %v1346 = vunpack.c.l.b16 %v138
    %v1347 = vunpack.c.h.b16 %v138
    %v1348 = vunpack.c.l.b16 %v139
    %v1349 = vunpack.c.h.b16 %v139
    %v1350 = vunpack.c.l.b16 %v140
    %v1351 = vunpack.c.h.b16 %v140
    %v1352 = vunpack.c.l.b16 %v141
    %v1353 = vunpack.c.h.b16 %v141
    %v1354 = vunpack.c.l.b16 %v142
    %v1355 = vunpack.c.h.b16 %v142
    %v1356 = vunpack.c.l.b16 %v143
    %v1357 = vunpack.c.h.b16 %v143
    %v1358 = vunpack.c.l.b16 %v144
    %v1359 = vunpack.c.h.b16 %v144
    %v1360 = vunpack.c.l.b16 %v145
    %v1361 = vunpack.c.h.b16 %v145
    %v1362 = vunpack.c.l.b16 %v146
    %v1363 = vunpack.c.h.b16 %v146
    %v1364 = vunpack.c.l.b16 %v147
    %v1365 = vunpack.c.h.b16 %v147
    %v1366 = vunpack.c.l.b16 %v148
    %v1367 = vunpack.c.h.b16 %v148
    %v1368 = vunpack.c.l.b16 %v149
    %v1369 = vunpack.c.h.b16 %v149
    %v1370 = vunpack.c.l.b16 %v150
    %v1371 = vunpack.c.h.b16 %v150
    %v1372 = vunpack.c.l.b16 %v151
    %v1373 = vunpack.c.h.b16 %v151
    %v1374 = vunpack.c.l.b16 %v152
    %v1375 = vunpack.c.h.b16 %v152
    %v1376 = vunpack.c.l.b16 %v153
    %v1377 = vunpack.c.h.b16 %v153
    %v1378 = vunpack.c.l.b16 %v154
    %v1379 = vunpack.c.h.b16 %v154
    %v1380 = vunpack.c.l.b16 %v155
    %v1381 = vunpack.c.h.b16 %v155
    %v1382 = vunpack.c.l.b16 %v156
    %v1383 = vunpack.c.h.b16 %v156
    %v1384 = vunpack.c.l.b16 %v157
    %v1385 = vunpack.c.h.b16 %v157
    %v1386 = vunpack.c.l.b16 %v158
    %v1387 = vunpack.c.h.b16 %v158
    %v1388 = vunpack.c.l.b16 %v159
    %v1389 = vunpack.c.h.b16 %v159
    %v1390 = vunpack.c.l.b16 %v160
    %v1391 = vunpack.c.h.b16 %v160
    %v1392 = vunpack.c.l.b16 %v161
    %v1393 = vunpack.c.h.b16 %v161
    %v1394 = vunpack.c.l.b16 %v162
    %v1395 = vunpack.c.h.b16 %v162
    %v1396 = vunpack.c.l.b16 %v163
    %v1397 = vunpack.c.h.b16 %v163
    %v1398 = vunpack.c.l.b16 %v164
    %v1399 = vunpack.c.h.b16 %v164
    %v1400 = vunpack.c.l.b16 %v165
    %v1401 = vunpack.c.h.b16 %v165
    %v1402 = vunpack.c.l.b16 %v166
    %v1403 = vunpack.c.h.b16 %v166
    %v1404 = vunpack.c.l.b16 %v167
    %v1405 = vunpack.c.h.b16 %v167
    %v1406 = vunpack.c.l.b16 %v168
    %v1407 = vunpack.c.h.b16 %v168
    %v1408 = vunpack.c.l.b16 %v169
    %v1409 = vunpack.c.h.b16 %v169
    %v1410 = vunpack.c.l.b16 %v170
    %v1411 = vunpack.c.h.b16 %v170
    %v1412 = vunpack.c.l.b16 %v171
    %v1413 = vunpack.c.h.b16 %v171
    %v1414 = vunpack.c.l.b16 %v172
    %v1415 = vunpack.c.h.b16 %v172
    %v1416 = vunpack.c.l.b16 %v173
    %v1417 = vunpack.c.h.b16 %v173
    %v1418 = vunpack.c.l.b16 %v174
    %v1419 = vunpack.c.h.b16 %v174
    %v1420 = vunpack.c.l.b16 %v175
    %v1421 = vunpack.c.h.b16 %v175
    %v1422 = vunpack.c.l.b16 %v176
    %v1423 = vunpack.c.h.b16 %v176
    %v1424 = vunpack.c.l.b16 %v177
    %v1425 = vunpack.c.h.b16 %v177
    %v1426 = vunpack.c.l.b16 %v178
    %v1427 = vunpack.c.h.b16 %v178
    %v1428 = vunpack.c.l.b16 %v179
    %v1429 = vunpack.c.h.b16 %v179
    %v1430 = vunpack.c.l.b16 %v180
    %v1431 = vunpack.c.h.b16 %v180
    %v1432 = vunpack.c.l.b16 %v181
    %v1433 = vunpack.c.h.b16 %v181
    %v1434 = vunpack.c.l.b16 %v182
    %v1435 = vunpack.c.h.b16 %v182
    %v1436 = vunpack.c.l.b16 %v183
    %v1437 = vunpack.c.h.b16 %v183
    %v1438 = vunpack.c.l.b16 %v184
    %v1439 = vunpack.c.h.b16 %v184
    %v1440 = vunpack.c.l.b16 %v185
    %v1441 = vunpack.c.h.b16 %v185
    %v1442 = vunpack.c.l.b16 %v186
    %v1443 = vunpack.c.h.b16 %v186
    %v1444 = vunpack.c.l.b16 %v187
    %v1445 = vunpack.c.h.b16 %v187
    %v1446 = vunpack.c.l.b16 %v188
    %v1447 = vunpack.c.h.b16 %v188
    %v1448 = vunpack.c.l.b16 %v189
    %v1449 = vunpack.c.h.b16 %v189
    %v1450 = vunpack.c.l.b16 %v190
    %v1451 = vunpack.c.h.b16 %v190
    %v1452 = vunpack.c.l.b16 %v191
    %v1453 = vunpack.c.h.b16 %v191
    %v1454 = vunpack.c.l.b16 %v192
    %v1455 = vunpack.c.h.b16 %v192
    %v1456 = vunpack.c.l.b16 %v193
    %v1457 = vunpack.c.h.b16 %v193
    %v1458 = vunpack.c.l.b16 %v194
    %v1459 = vunpack.c.h.b16 %v194
    %v1460 = vunpack.c.l.b16 %v195
    %v1461 = vunpack.c.h.b16 %v195
    %v1462 = vunpack.c.l.b16 %v196
    %v1463 = vunpack.c.h.b16 %v196
    %v1464 = vunpack.c.l.b16 %v197
    %v1465 = vunpack.c.h.b16 %v197
    %v1466 = vunpack.c.l.b16 %v198
    %v1467 = vunpack.c.h.b16 %v198
    %v1468 = vunpack.c.l.b16 %v199
    %v1469 = vunpack.c.h.b16 %v199
    %v1470 = vunpack.c.l.b16 %v200
    %v1471 = vunpack.c.h.b16 %v200
    %v1472 = vunpack.c.l.b16 %v201
    %v1473 = vunpack.c.h.b16 %v201
    %v1474 = vunpack.c.l.b16 %v202
    %v1475 = vunpack.c.h.b16 %v202
    %v1476 = vunpack.c.l.b16 %v203
    %v1477 = vunpack.c.h.b16 %v203
    %v1478 = vunpack.c.l.b16 %v204
    %v1479 = vunpack.c.h.b16 %v204
    %v1480 = vunpack.c.l.b16 %v205
    %v1481 = vunpack.c.h.b16 %v205
    %v1482 = vunpack.c.l.b16 %v206
    %v1483 = vunpack.c.h.b16 %v206
    %v1484 = vunpack.c.l.b16 %v207
    %v1485 = vunpack.c.h.b16 %v207
    %v1486 = vunpack.c.l.b16 %v208
    %v1487 = vunpack.c.h.b16 %v208
    %v1488 = vunpack.c.l.b16 %v209
    %v1489 = vunpack.c.h.b16 %v209
    %v1490 = vunpack.c.l.b16 %v210
    %v1491 = vunpack.c.h.b16 %v210
    %v1492 = vunpack.c.l.b16 %v211
    %v1493 = vunpack.c.h.b16 %v211
    %v1494 = vunpack.c.l.b16 %v212
    %v1495 = vunpack.c.h.b16 %v212
    %v1496 = vunpack.c.l.b16 %v213
    %v1497 = vunpack.c.h.b16 %v213
    %v1498 = vunpack.c.l.b16 %v214
    %v1499 = vunpack.c.h.b16 %v214
    %v1500 = vunpack.c.l.b16 %v215
    %v1501 = vunpack.c.h.b16 %v215
    %v1502 = vunpack.c.l.b16 %v216
    %v1503 = vunpack.c.h.b16 %v216
    %v1504 = vunpack.c.l.b16 %v217
    %v1505 = vunpack.c.h.b16 %v217
    %v1506 = vunpack.c.l.b16 %v218
    %v1507 = vunpack.c.h.b16 %v218
    %v1508 = vunpack.c.l.b16 %v219
    %v1509 = vunpack.c.h.b16 %v219
    %v1510 = vunpack.c.l.b16 %v220
    %v1511 = vunpack.c.h.b16 %v220
    %v1512 = vunpack.c.l.b16 %v221
    %v1513 = vunpack.c.h.b16 %v221
    %v1514 = vunpack.c.l.b16 %v222
    %v1515 = vunpack.c.h.b16 %v222
    %v1516 = vunpack.c.l.b16 %v223
    %v1517 = vunpack.c.h.b16 %v223
    %v1518 = vunpack.c.l.b16 %v224
    %v1519 = vunpack.c.h.b16 %v224
    %v1520 = vunpack.c.l.b16 %v225
    %v1521 = vunpack.c.h.b16 %v225
    %v1522 = vunpack.c.l.b16 %v226
    %v1523 = vunpack.c.h.b16 %v226
    %v1524 = vunpack.c.l.b16 %v227
    %v1525 = vunpack.c.h.b16 %v227
    %v1526 = vunpack.c.l.b16 %v228
    %v1527 = vunpack.c.h.b16 %v228
    %v1528 = vunpack.c.l.b16 %v229
    %v1529 = vunpack.c.h.b16 %v229
    %v1530 = vunpack.c.l.b16 %v230
    %v1531 = vunpack.c.h.b16 %v230
    %v1532 = vunpack.c.l.b16 %v231
    %v1533 = vunpack.c.h.b16 %v231
    %v1534 = vunpack.c.l.b16 %v232
    %v1535 = vunpack.c.h.b16 %v232
    %v1536 = vunpack.c.l.b16 %v233
    %v1537 = vunpack.c.h.b16 %v233
    %v1538 = vunpack.c.l.b16 %v234
    %v1539 = vunpack.c.h.b16 %v234
    %v1540 = vunpack.c.l.b16 %v235
    %v1541 = vunpack.c.h.b16 %v235
    %v1542 = vunpack.c.l.b16 %v236
    %v1543 = vunpack.c.h.b16 %v236
    %v1544 = vunpack.c.l.b16 %v237
    %v1545 = vunpack.c.h.b16 %v237
    %v1546 = vunpack.c.l.b16 %v238
    %v1547 = vunpack.c.h.b16 %v238
    %v1548 = vunpack.c.l.b16 %v239
    %v1549 = vunpack.c.h.b16 %v239
    %v1550 = vunpack.c.l.b16 %v240
    %v1551 = vunpack.c.h.b16 %v240
    %v1552 = vunpack.c.l.b16 %v241
    %v1553 = vunpack.c.h.b16 %v241
    %v1554 = vunpack.c.l.b16 %v242
    %v1555 = vunpack.c.h.b16 %v242
    %v1556 = vunpack.c.l.b16 %v243
    %v1557 = vunpack.c.h.b16 %v243
    %v1558 = vunpack.c.l.b16 %v244
    %v1559 = vunpack.c.h.b16 %v244
    %v1560 = vunpack.c.l.b16 %v245
    %v1561 = vunpack.c.h.b16 %v245
    %v1562 = vunpack.c.l.b16 %v246
    %v1563 = vunpack.c.h.b16 %v246
    %v1564 = vunpack.c.l.b16 %v247
    %v1565 = vunpack.c.h.b16 %v247
    %v1566 = vunpack.c.l.b16 %v248
    %v1567 = vunpack.c.h.b16 %v248
    %v1568 = vunpack.c.l.b16 %v249
    %v1569 = vunpack.c.h.b16 %v249
    %v1570 = vpack.c.b16 %v1318, %v1314
    %v1571 = vpack.c.b16 %v1319, %v1315
    %v1572 = vpack.c.b16 %v1320, %v1316
    %v1573 = vpack.c.b16 %v1321, %v1317
    %v1574 = vpack.c.b16 %v1326, %v1322
    %v1575 = vpack.c.b16 %v1327, %v1323
    %v1576 = vpack.c.b16 %v1328, %v1324
    %v1577 = vpack.c.b16 %v1329, %v1325
    %v1578 = vpack.c.b16 %v1334, %v1330
    %v1579 = vpack.c.b16 %v1335, %v1331
    %v1580 = vpack.c.b16 %v1336, %v1332
    %v1581 = vpack.c.b16 %v1337, %v1333
    %v1582 = vpack.c.b16 %v1342, %v1338
    %v1583 = vpack.c.b16 %v1343, %v1339
    %v1584 = vpack.c.b16 %v1344, %v1340
    %v1585 = vpack.c.b16 %v1345, %v1341
    %v1586 = vpack.c.b16 %v1350, %v1346
    %v1587 = vpack.c.b16 %v1351, %v1347
    %v1588 = vpack.c.b16 %v1352, %v1348
    %v1589 = vpack.c.b16 %v1353, %v1349
    %v1590 = vpack.c.b16 %v1358, %v1354
    %v1591 = vpack.c.b16 %v1359, %v1355
    %v1592 = vpack.c.b16 %v1360, %v1356
    %v1593 = vpack.c.b16 %v1361, %v1357
    %v1594 = vpack.c.b16 %v1366, %v1362
    %v1595 = vpack.c.b16 %v1367, %v1363
    %v1596 = vpack.c.b16 %v1368, %v1364
    %v1597 = vpack.c.b16 %v1369, %v1365
    %v1598 = vpack.c.b16 %v1374, %v1370
    %v1599 = vpack.c.b16 %v1375, %v1371
    %v1600 = vpack.c.b16 %v1376, %v1372
    %v1601 = vpack.c.b16 %v1377, %v1373
    %v1602 = vpack.c.b16 %v1382, %v1378
    %v1603 = vpack.c.b16 %v1383, %v1379
    %v1604 = vpack.c.b16 %v1384, %v1380
    %v1605 = vpack.c.b16 %v1385, %v1381
    %v1606 = vpack.c.b16 %v1390, %v1386
    %v1607 = vpack.c.b16 %v1391, %v1387
    %v1608 = vpack.c.b16 %v1392, %v1388
    %v1609 = vpack.c.b16 %v1393, %v1389
    %v1610 = vpack.c.b16 %v1398, %v1394
    %v1611 = vpack.c.b16 %v1399, %v1395
    %v1612 = vpack.c.b16 %v1400, %v1396
    %v1613 = vpack.c.b16 %v1401, %v1397
    %v1614 = vpack.c.b16 %v1406, %v1402
    %v1615 = vpack.c.b16 %v1407, %v1403
    %v1616 = vpack.c.b16 %v1408, %v1404
    %v1617 = vpack.c.b16 %v1409, %v1405
    %v1618 = vpack.c.b16 %v1414, %v1410
    %v1619 = vpack.c.b16 %v1415, %v1411
    %v1620 = vpack.c.b16 %v1416, %v1412
    %v1621 = vpack.c.b16 %v1417, %v1413
    %v1622 = vpack.c.b16 %v1422, %v1418
    %v1623 = vpack.c.b16 %v1423, %v1419
    %v1624 = vpack.c.b16 %v1424, %v1420
    %v1625 = vpack.c.b16 %v1425, %v1421
    %v1626 = vpack.c.b16 %v1430, %v1426
    %v1627 = vpack.c.b16 %v1431, %v1427
    %v1628 = vpack.c.b16 %v1432, %v1428
    %v1629 = vpack.c.b16 %v1433, %v1429
    %v1630 = vpack.c.b16 %v1438, %v1434
    %v1631 = vpack.c.b16 %v1439, %v1435
    %v1632 = vpack.c.b16 %v1440, %v1436
    %v1633 = vpack.c.b16 %v1441, %v1437
    %v1634 = vpack.c.b16 %v1446, %v1442
    %v1635 = vpack.c.b16 %v1447, %v1443
    %v1636 = vpack.c.b16 %v1448, %v1444
    %v1637 = vpack.c.b16 %v1449, %v1445
    %v1638 = vpack.c.b16 %v1454, %v1450
    %v1639 = vpack.c.b16 %v1455, %v1451
    %v1640 = vpack.c.b16 %v1456, %v1452
    %v1641 = vpack.c.b16 %v1457, %v1453
    %v1642 = vpack.c.b16 %v1462, %v1458
    %v1643 = vpack.c.b16 %v1463, %v1459
    %v1644 = vpack.c.b16 %v1464, %v1460
    %v1645 = vpack.c.b16 %v1465, %v1461
    %v1646 = vpack.c.b16 %v1470, %v1466
    %v1647 = vpack.c.b16 %v1471, %v1467
    %v1648 = vpack.c.b16 %v1472, %v1468
    %v1649 = vpack.c.b16 %v1473, %v1469
    %v1650 = vpack.c.b16 %v1478, %v1474
    %v1651 = vpack.c.b16 %v1479, %v1475
    %v1652 = vpack.c.b16 %v1480, %v1476
    %v1653 = vpack.c.b16 %v1481, %v1477
    %v1654 = vpack.c.b16 %v1486, %v1482
    %v1655 = vpack.c.b16 %v1487, %v1483
    %v1656 = vpack.c.b16 %v1488, %v1484
    %v1657 = vpack.c.b16 %v1489, %v1485
    %v1658 = vpack.c.b16 %v1494, %v1490
    %v1659 = vpack.c.b16 %v1495, %v1491
    %v1660 = vpack.c.b16 %v1496, %v1492
    %v1661 = vpack.c.b16 %v1497, %v1493
    %v1662 = vpack.c.b16 %v1502, %v1498
    %v1663 = vpack.c.b16 %v1503, %v1499
    %v1664 = vpack.c.b16 %v1504, %v1500
    %v1665 = vpack.c.b16 %v1505, %v1501
    %v1666 = vpack.c.b16 %v1510, %v1506
    %v1667 = vpack.c.b16 %v1511, %v1507
    %v1668 = vpack.c.b16 %v1512, %v1508
    %v1669 = vpack.c.b16 %v1513, %v1509
    %v1670 = vpack.c.b16 %v1518, %v1514
    %v1671 = vpack.c.b16 %v1519, %v1515
    %v1672 = vpack.c.b16 %v1520, %v1516
    %v1673 = vpack.c.b16 %v1521, %v1517
    %v1674 = vpack.c.b16 %v1526, %v1522
    %v1675 = vpack.c.b16 %v1527, %v1523
    %v1676 = vpack.c.b16 %v1528, %v1524
    %v1677 = vpack.c.b16 %v1529, %v1525
    %v1678 = vpack.c.b16 %v1534, %v1530
    %v1679 = vpack.c.b16 %v1535, %v1531
    %v1680 = vpack.c.b16 %v1536, %v1532
    %v1681 = vpack.c.b16 %v1537, %v1533
    %v1682 = vpack.c.b16 %v1542, %v1538
    %v1683 = vpack.c.b16 %v1543, %v1539
    %v1684 = vpack.c.b16 %v1544, %v1540
    %v1685 = vpack.c.b16 %v1545, %v1541
    %v1686 = vpack.c.b16 %v1550, %v1546
    %v1687 = vpack.c.b16 %v1551, %v1547
    %v1688 = vpack.c.b16 %v1552, %v1548
    %v1689 = vpack.c.b16 %v1553, %v1549
    %v1690 = vpack.c.b16 %v1558, %v1554
    %v1691 = vpack.c.b16 %v1559, %v1555
    %v1692 = vpack.c.b16 %v1560, %v1556
    %v1693 = vpack.c.b16 %v1561, %v1557
    %v1694 = vpack.c.b16 %v1566, %v1562
    %v1695 = vpack.c.b16 %v1567, %v1563
    %v1696 = vpack.c.b16 %v1568, %v1564
    %v1697 = vpack.c.b16 %v1569, %v1565
    %1826 = vmatprep.subr.bf16.mxu0 %v1599
    %1827 = vmatpush1.bf16.msra.mxu0 %v1598
    %1828 = vmatprep.subr.bf16.mxu0 %v1595
    %1829 = vmatpush1.bf16.msra.mxu0 %v1594
    %1830 = vmatprep.subr.bf16.mxu0 %v1591
    %1831 = vmatpush1.bf16.msra.mxu0 %v1590
    %1832 = vmatprep.subr.bf16.mxu0 %v1587
    %1833 = vmatpush1.bf16.msra.mxu0 %v1586
    %1834 = vmatprep.subr.bf16.mxu0 %v1583
    %1835 = vmatpush1.bf16.msra.mxu0 %v1582
    %1836 = vmatprep.subr.bf16.mxu0 %v1579
    %1837 = vmatpush1.bf16.msra.mxu0 %v1578
    %1838 = vmatprep.subr.bf16.mxu0 %v1575
    %1839 = vmatpush1.bf16.msra.mxu0 %v1574
    %1840 = vmatprep.subr.bf16.mxu0 %v1571
    %1841 = vmatpush1.bf16.msra.mxu0 %v1570
    %1842 = vmatprep.subr.bf16.mxu0 %v1631
    %1843 = vmatpush2.bf16.msra.mxu0 %v1630
    %1844 = vmatprep.subr.bf16.mxu0 %v1627
    %1845 = vmatpush2.bf16.msra.mxu0 %v1626
    %1846 = vmatprep.subr.bf16.mxu0 %v1623
    %1847 = vmatpush2.bf16.msra.mxu0 %v1622
    %1848 = vmatprep.subr.bf16.mxu0 %v1619
    %1849 = vmatpush2.bf16.msra.mxu0 %v1618
    %1850 = vmatprep.subr.bf16.mxu0 %v1615
    %1851 = vmatpush2.bf16.msra.mxu0 %v1614
    %1852 = vmatprep.subr.bf16.mxu0 %v1611
    %1853 = vmatpush2.bf16.msra.mxu0 %v1610
    %1854 = vmatprep.subr.bf16.mxu0 %v1607
    %1855 = vmatpush2.bf16.msra.mxu0 %v1606
    %1856 = vmatprep.subr.bf16.mxu0 %v1603
    %1857 = vmatpush2.bf16.msra.mxu0 %v1602
    %1858 = vmatprep.mubr.bf16.mxu0 %v119
    %1859 = vmatmul.mubr.bf16.gmra.mxu0 %v118
    %v1860 = vpop.f32.mrf.mxu0
    %v1861 = vadd.f32 %v1098, %v1860
    %v1862 = vpop.f32.mrf.mxu0
    %v1863 = vadd.f32 %v1100, %v1862
    %v1864 = vpop.f32.mrf.mxu0
    %v1865 = vpop.f32.mrf.mxu0
    %1866 = vdwg.mxu0
    %1867 = vmatprep.subr.bf16.mxu0 %v1663
    %1868 = vmatpush1.bf16.msra.mxu0 %v1662
    %1869 = vmatprep.subr.bf16.mxu0 %v1659
    %1870 = vmatpush1.bf16.msra.mxu0 %v1658
    %1871 = vmatprep.subr.bf16.mxu0 %v1655
    %1872 = vmatpush1.bf16.msra.mxu0 %v1654
    %1873 = vmatprep.subr.bf16.mxu0 %v1651
    %1874 = vmatpush1.bf16.msra.mxu0 %v1650
    %1875 = vmatprep.subr.bf16.mxu0 %v1647
    %1876 = vmatpush1.bf16.msra.mxu0 %v1646
    %1877 = vmatprep.subr.bf16.mxu0 %v1643
    %1878 = vmatpush1.bf16.msra.mxu0 %v1642
    %1879 = vmatprep.subr.bf16.mxu0 %v1639
    %1880 = vmatpush1.bf16.msra.mxu0 %v1638
    %1881 = vmatprep.subr.bf16.mxu0 %v1635
    %1882 = vmatpush1.bf16.msra.mxu0 %v1634
    %1883 = vmatprep.subr.bf16.mxu0 %v1695
    %1884 = vmatpush2.bf16.msra.mxu0 %v1694
    %1885 = vmatprep.subr.bf16.mxu0 %v1691
    %1886 = vmatpush2.bf16.msra.mxu0 %v1690
    %1887 = vmatprep.subr.bf16.mxu0 %v1687
    %1888 = vmatpush2.bf16.msra.mxu0 %v1686
    %1889 = vmatprep.subr.bf16.mxu0 %v1683
    %1890 = vmatpush2.bf16.msra.mxu0 %v1682
    %1891 = vmatprep.subr.bf16.mxu0 %v1679
    %1892 = vmatpush2.bf16.msra.mxu0 %v1678
    %1893 = vmatprep.subr.bf16.mxu0 %v1675
    %1894 = vmatpush2.bf16.msra.mxu0 %v1674
    %1895 = vmatprep.subr.bf16.mxu0 %v1671
    %1896 = vmatpush2.bf16.msra.mxu0 %v1670
    %1897 = vmatprep.subr.bf16.mxu0 %v1667
    %1898 = vmatpush2.bf16.msra.mxu0 %v1666
    %1899 = vmatprep.mubr.bf16.mxu0 %v121
    %1900 = vmatmul.mubr.bf16.gmra.mxu0 %v120
    %v1901 = vpop.f32.mrf.mxu0
    %v1902 = vadd.f32 %v1861, %v1901
    %v1903 = vpop.f32.mrf.mxu0
    %v1904 = vadd.f32 %v1863, %v1903
    %v1905 = vpop.f32.mrf.mxu0
    %v1906 = vpop.f32.mrf.mxu0
    %1907 = vdwg.mxu0
    %1908 = vmatprep.subr.bf16.mxu0 %v1601
    %1909 = vmatpush1.bf16.msra.mxu0 %v1600
    %1910 = vmatprep.subr.bf16.mxu0 %v1597
    %1911 = vmatpush1.bf16.msra.mxu0 %v1596
    %1912 = vmatprep.subr.bf16.mxu0 %v1593
    %1913 = vmatpush1.bf16.msra.mxu0 %v1592
    %1914 = vmatprep.subr.bf16.mxu0 %v1589
    %1915 = vmatpush1.bf16.msra.mxu0 %v1588
    %1916 = vmatprep.subr.bf16.mxu0 %v1585
    %1917 = vmatpush1.bf16.msra.mxu0 %v1584
    %1918 = vmatprep.subr.bf16.mxu0 %v1581
    %1919 = vmatpush1.bf16.msra.mxu0 %v1580
    %1920 = vmatprep.subr.bf16.mxu0 %v1577
    %1921 = vmatpush1.bf16.msra.mxu0 %v1576
    %1922 = vmatprep.subr.bf16.mxu0 %v1573
    %1923 = vmatpush1.bf16.msra.mxu0 %v1572
    %1924 = vmatprep.subr.bf16.mxu0 %v1633
    %1925 = vmatpush2.bf16.msra.mxu0 %v1632
    %1926 = vmatprep.subr.bf16.mxu0 %v1629
    %1927 = vmatpush2.bf16.msra.mxu0 %v1628
    %1928 = vmatprep.subr.bf16.mxu0 %v1625
    %1929 = vmatpush2.bf16.msra.mxu0 %v1624
    %1930 = vmatprep.subr.bf16.mxu0 %v1621
    %1931 = vmatpush2.bf16.msra.mxu0 %v1620
    %1932 = vmatprep.subr.bf16.mxu0 %v1617
    %1933 = vmatpush2.bf16.msra.mxu0 %v1616
    %1934 = vmatprep.subr.bf16.mxu0 %v1613
    %1935 = vmatpush2.bf16.msra.mxu0 %v1612
    %1936 = vmatprep.subr.bf16.mxu0 %v1609
    %1937 = vmatpush2.bf16.msra.mxu0 %v1608
    %1938 = vmatprep.subr.bf16.mxu0 %v1605
    %1939 = vmatpush2.bf16.msra.mxu0 %v1604
    %1940 = vmatprep.mubr.bf16.mxu0 %v119
    %1941 = vmatmul.mubr.bf16.gmra.mxu0 %v118
    %v1942 = vpop.f32.mrf.mxu0
    %v1943 = vadd.f32 %v1180, %v1942
    %v1944 = vpop.f32.mrf.mxu0
    %v1945 = vadd.f32 %v1182, %v1944
    %v1946 = vpop.f32.mrf.mxu0
    %v1947 = vpop.f32.mrf.mxu0
    %1948 = vdwg.mxu0
    %1949 = vmatprep.subr.bf16.mxu0 %v1665
    %1950 = vmatpush1.bf16.msra.mxu0 %v1664
    %1951 = vmatprep.subr.bf16.mxu0 %v1661
    %1952 = vmatpush1.bf16.msra.mxu0 %v1660
    %1953 = vmatprep.subr.bf16.mxu0 %v1657
    %1954 = vmatpush1.bf16.msra.mxu0 %v1656
    %1955 = vmatprep.subr.bf16.mxu0 %v1653
    %1956 = vmatpush1.bf16.msra.mxu0 %v1652
    %1957 = vmatprep.subr.bf16.mxu0 %v1649
    %1958 = vmatpush1.bf16.msra.mxu0 %v1648
    %1959 = vmatprep.subr.bf16.mxu0 %v1645
    %1960 = vmatpush1.bf16.msra.mxu0 %v1644
    %1961 = vmatprep.subr.bf16.mxu0 %v1641
    %1962 = vmatpush1.bf16.msra.mxu0 %v1640
    %1963 = vmatprep.subr.bf16.mxu0 %v1637
    %1964 = vmatpush1.bf16.msra.mxu0 %v1636
    %1965 = vmatprep.subr.bf16.mxu0 %v1697
    %1966 = vmatpush2.bf16.msra.mxu0 %v1696
    %1967 = vmatprep.subr.bf16.mxu0 %v1693
    %1968 = vmatpush2.bf16.msra.mxu0 %v1692
    %1969 = vmatprep.subr.bf16.mxu0 %v1689
    %1970 = vmatpush2.bf16.msra.mxu0 %v1688
    %1971 = vmatprep.subr.bf16.mxu0 %v1685
    %1972 = vmatpush2.bf16.msra.mxu0 %v1684
    %1973 = vmatprep.subr.bf16.mxu0 %v1681
    %1974 = vmatpush2.bf16.msra.mxu0 %v1680
    %1975 = vmatprep.subr.bf16.mxu0 %v1677
    %1976 = vmatpush2.bf16.msra.mxu0 %v1676
    %1977 = vmatprep.subr.bf16.mxu0 %v1673
    %1978 = vmatpush2.bf16.msra.mxu0 %v1672
    %1979 = vmatprep.subr.bf16.mxu0 %v1669
    %1980 = vmatpush2.bf16.msra.mxu0 %v1668
    %1981 = vmatprep.mubr.bf16.mxu0 %v121
    %1982 = vmatmul.mubr.bf16.gmra.mxu0 %v120
    %v1983 = vpop.f32.mrf.mxu0
    %v1984 = vadd.f32 %v1943, %v1983
    %v1985 = vpop.f32.mrf.mxu0
    %v1986 = vadd.f32 %v1945, %v1985
    %v1987 = vpop.f32.mrf.mxu0
    %v1988 = vpop.f32.mrf.mxu0
    %1989 = vdwg.mxu0
    %v1990 = vld [vmem:[%s4] sm:$0xf]
    %v1992 = vlaneseq
    %v1993 = vshrl.u32 %v1992, 7
    %v1994 = vsub.s32 0, %v1993
    %v1995 = vrot.slane %v1990, %v1994
    %v1996 = vlaneseq
    %v1997 = vshrl.u32 %v1996, 7
    %v1998 = vsub.s32 1, %v1997
    %v1999 = vrot.slane %v1990, %v1998
    %v2000 = vlaneseq
    %v2001 = vshrl.u32 %v2000, 7
    %v2002 = vsub.s32 2, %v2001
    %v2003 = vrot.slane %v1990, %v2002
    %v2004 = vlaneseq
    %v2005 = vshrl.u32 %v2004, 7
    %v2006 = vsub.s32 3, %v2005
    %v2007 = vrot.slane %v1990, %v2006
    %v2012 = vadd.f32 %v1902, %v1995
    %v2013 = vadd.f32 %v1904, %v1999
    %v2014 = vadd.f32 %v1984, %v2003
    %v2015 = vadd.f32 %v1986, %v2007
    %v2016 = vmax.f32 %v2012, 0.0
    %v2017 = vmax.f32 %v2013, 0.0
    %v2018 = vmax.f32 %v2014, 0.0
    %v2019 = vmax.f32 %v2015, 0.0
    %v2020 = vpack.c.bf16 %v2016, %v2016
    %v2021 = vpack.c.bf16 %v2017, %v2017
    %v2022 = vpack.c.bf16 %v2018, %v2018
    %v2023 = vpack.c.bf16 %v2019, %v2019
    %v2024 = vld [vmem:[#allocation8] sm:$0xff]
    %v2025 = vld [vmem:[#allocation8 + $0x8] sm:$0xff]
    %v2026 = vld [vmem:[#allocation8 + $0x10] sm:$0xff]
    %v2027 = vld [vmem:[#allocation8 + $0x18] sm:$0xff]
    %v2028 = vld [vmem:[#allocation8 + $0x20] sm:$0xff]
    %v2029 = vld [vmem:[#allocation8 + $0x28] sm:$0xff]
    %v2030 = vld [vmem:[#allocation8 + $0x30] sm:$0xff]
    %v2031 = vld [vmem:[#allocation8 + $0x38] sm:$0xff]
    %v2032 = vld [vmem:[#allocation8 + $0x40] sm:$0xff]
    %v2033 = vld [vmem:[#allocation8 + $0x48] sm:$0xff]
    %v2034 = vld [vmem:[#allocation8 + $0x50] sm:$0xff]
    %v2035 = vld [vmem:[#allocation8 + $0x58] sm:$0xff]
    %v2036 = vld [vmem:[#allocation8 + $0x60] sm:$0xff]
    %v2037 = vld [vmem:[#allocation8 + $0x68] sm:$0xff]
    %v2038 = vld [vmem:[#allocation8 + $0x70] sm:$0xff]
    %v2039 = vld [vmem:[#allocation8 + $0x78] sm:$0xff]
    %v2040 = vld [vmem:[#allocation8 + $0x80] sm:$0xff]
    %v2041 = vld [vmem:[#allocation8 + $0x88] sm:$0xff]
    %v2042 = vld [vmem:[#allocation8 + $0x90] sm:$0xff]
    %v2043 = vld [vmem:[#allocation8 + $0x98] sm:$0xff]
    %v2044 = vld [vmem:[#allocation8 + $0xa0] sm:$0xff]
    %v2045 = vld [vmem:[#allocation8 + $0xa8] sm:$0xff]
    %v2046 = vld [vmem:[#allocation8 + $0xb0] sm:$0xff]
    %v2047 = vld [vmem:[#allocation8 + $0xb8] sm:$0xff]
    %v2048 = vld [vmem:[#allocation8 + $0xc0] sm:$0xff]
    %v2049 = vld [vmem:[#allocation8 + $0xc8] sm:$0xff]
    %v2050 = vld [vmem:[#allocation8 + $0xd0] sm:$0xff]
    %v2051 = vld [vmem:[#allocation8 + $0xd8] sm:$0xff]
    %v2052 = vld [vmem:[#allocation8 + $0xe0] sm:$0xff]
    %v2053 = vld [vmem:[#allocation8 + $0xe8] sm:$0xff]
    %v2054 = vld [vmem:[#allocation8 + $0xf0] sm:$0xff]
    %v2055 = vld [vmem:[#allocation8 + $0xf8] sm:$0xff]
    %v2056 = vld [vmem:[#allocation8 + $0x100] sm:$0xff]
    %v2057 = vld [vmem:[#allocation8 + $0x108] sm:$0xff]
    %v2058 = vld [vmem:[#allocation8 + $0x110] sm:$0xff]
    %v2059 = vld [vmem:[#allocation8 + $0x118] sm:$0xff]
    %v2060 = vld [vmem:[#allocation8 + $0x120] sm:$0xff]
    %v2061 = vld [vmem:[#allocation8 + $0x128] sm:$0xff]
    %v2062 = vld [vmem:[#allocation8 + $0x130] sm:$0xff]
    %v2063 = vld [vmem:[#allocation8 + $0x138] sm:$0xff]
    %v2064 = vld [vmem:[#allocation8 + $0x140] sm:$0xff]
    %v2065 = vld [vmem:[#allocation8 + $0x148] sm:$0xff]
    %v2066 = vld [vmem:[#allocation8 + $0x150] sm:$0xff]
    %v2067 = vld [vmem:[#allocation8 + $0x158] sm:$0xff]
    %v2068 = vld [vmem:[#allocation8 + $0x160] sm:$0xff]
    %v2069 = vld [vmem:[#allocation8 + $0x168] sm:$0xff]
    %v2070 = vld [vmem:[#allocation8 + $0x170] sm:$0xff]
    %v2071 = vld [vmem:[#allocation8 + $0x178] sm:$0xff]
    %v2072 = vld [vmem:[#allocation8 + $0x180] sm:$0xff]
    %v2073 = vld [vmem:[#allocation8 + $0x188] sm:$0xff]
    %v2074 = vld [vmem:[#allocation8 + $0x190] sm:$0xff]
    %v2075 = vld [vmem:[#allocation8 + $0x198] sm:$0xff]
    %v2076 = vld [vmem:[#allocation8 + $0x1a0] sm:$0xff]
    %v2077 = vld [vmem:[#allocation8 + $0x1a8] sm:$0xff]
    %v2078 = vld [vmem:[#allocation8 + $0x1b0] sm:$0xff]
    %v2079 = vld [vmem:[#allocation8 + $0x1b8] sm:$0xff]
    %v2080 = vld [vmem:[#allocation8 + $0x1c0] sm:$0xff]
    %v2081 = vld [vmem:[#allocation8 + $0x1c8] sm:$0xff]
    %v2082 = vld [vmem:[#allocation8 + $0x1d0] sm:$0xff]
    %v2083 = vld [vmem:[#allocation8 + $0x1d8] sm:$0xff]
    %v2084 = vld [vmem:[#allocation8 + $0x1e0] sm:$0xff]
    %v2085 = vld [vmem:[#allocation8 + $0x1e8] sm:$0xff]
    %v2086 = vld [vmem:[#allocation8 + $0x1f0] sm:$0xff]
    %v2087 = vld [vmem:[#allocation8 + $0x1f8] sm:$0xff]
    %v2088 = vld [vmem:[%s6] sm:$0x3]
    %v2090 = vlaneseq
    %v2091 = vshrl.u32 %v2090, 7
    %v2092 = vsub.s32 0, %v2091
    %v2093 = vrot.slane %v2088, %v2092
    %v2094 = vlaneseq
    %v2095 = vshrl.u32 %v2094, 7
    %v2096 = vsub.s32 1, %v2095
    %v2097 = vrot.slane %v2088, %v2096
    %v2164 = vunpack.c.l.b16 %v2024
    %v2165 = vunpack.c.h.b16 %v2024
    %v2166 = vunpack.c.l.b16 %v2025
    %v2167 = vunpack.c.h.b16 %v2025
    %v2168 = vunpack.c.l.b16 %v2026
    %v2169 = vunpack.c.h.b16 %v2026
    %v2170 = vunpack.c.l.b16 %v2027
    %v2171 = vunpack.c.h.b16 %v2027
    %v2172 = vunpack.c.l.b16 %v2028
    %v2173 = vunpack.c.h.b16 %v2028
    %v2174 = vunpack.c.l.b16 %v2029
    %v2175 = vunpack.c.h.b16 %v2029
    %v2176 = vunpack.c.l.b16 %v2030
    %v2177 = vunpack.c.h.b16 %v2030
    %v2178 = vunpack.c.l.b16 %v2031
    %v2179 = vunpack.c.h.b16 %v2031
    %v2180 = vunpack.c.l.b16 %v2032
    %v2181 = vunpack.c.h.b16 %v2032
    %v2182 = vunpack.c.l.b16 %v2033
    %v2183 = vunpack.c.h.b16 %v2033
    %v2184 = vunpack.c.l.b16 %v2034
    %v2185 = vunpack.c.h.b16 %v2034
    %v2186 = vunpack.c.l.b16 %v2035
    %v2187 = vunpack.c.h.b16 %v2035
    %v2188 = vunpack.c.l.b16 %v2036
    %v2189 = vunpack.c.h.b16 %v2036
    %v2190 = vunpack.c.l.b16 %v2037
    %v2191 = vunpack.c.h.b16 %v2037
    %v2192 = vunpack.c.l.b16 %v2038
    %v2193 = vunpack.c.h.b16 %v2038
    %v2194 = vunpack.c.l.b16 %v2039
    %v2195 = vunpack.c.h.b16 %v2039
    %v2196 = vunpack.c.l.b16 %v2040
    %v2197 = vunpack.c.h.b16 %v2040
    %v2198 = vunpack.c.l.b16 %v2041
    %v2199 = vunpack.c.h.b16 %v2041
    %v2200 = vunpack.c.l.b16 %v2042
    %v2201 = vunpack.c.h.b16 %v2042
    %v2202 = vunpack.c.l.b16 %v2043
    %v2203 = vunpack.c.h.b16 %v2043
    %v2204 = vunpack.c.l.b16 %v2044
    %v2205 = vunpack.c.h.b16 %v2044
    %v2206 = vunpack.c.l.b16 %v2045
    %v2207 = vunpack.c.h.b16 %v2045
    %v2208 = vunpack.c.l.b16 %v2046
    %v2209 = vunpack.c.h.b16 %v2046
    %v2210 = vunpack.c.l.b16 %v2047
    %v2211 = vunpack.c.h.b16 %v2047
    %v2212 = vunpack.c.l.b16 %v2048
    %v2213 = vunpack.c.h.b16 %v2048
    %v2214 = vunpack.c.l.b16 %v2049
    %v2215 = vunpack.c.h.b16 %v2049
    %v2216 = vunpack.c.l.b16 %v2050
    %v2217 = vunpack.c.h.b16 %v2050
    %v2218 = vunpack.c.l.b16 %v2051
    %v2219 = vunpack.c.h.b16 %v2051
    %v2220 = vunpack.c.l.b16 %v2052
    %v2221 = vunpack.c.h.b16 %v2052
    %v2222 = vunpack.c.l.b16 %v2053
    %v2223 = vunpack.c.h.b16 %v2053
    %v2224 = vunpack.c.l.b16 %v2054
    %v2225 = vunpack.c.h.b16 %v2054
    %v2226 = vunpack.c.l.b16 %v2055
    %v2227 = vunpack.c.h.b16 %v2055
    %v2228 = vunpack.c.l.b16 %v2056
    %v2229 = vunpack.c.h.b16 %v2056
    %v2230 = vunpack.c.l.b16 %v2057
    %v2231 = vunpack.c.h.b16 %v2057
    %v2232 = vunpack.c.l.b16 %v2058
    %v2233 = vunpack.c.h.b16 %v2058
    %v2234 = vunpack.c.l.b16 %v2059
    %v2235 = vunpack.c.h.b16 %v2059
    %v2236 = vunpack.c.l.b16 %v2060
    %v2237 = vunpack.c.h.b16 %v2060
    %v2238 = vunpack.c.l.b16 %v2061
    %v2239 = vunpack.c.h.b16 %v2061
    %v2240 = vunpack.c.l.b16 %v2062
    %v2241 = vunpack.c.h.b16 %v2062
    %v2242 = vunpack.c.l.b16 %v2063
    %v2243 = vunpack.c.h.b16 %v2063
    %v2244 = vunpack.c.l.b16 %v2064
    %v2245 = vunpack.c.h.b16 %v2064
    %v2246 = vunpack.c.l.b16 %v2065
    %v2247 = vunpack.c.h.b16 %v2065
    %v2248 = vunpack.c.l.b16 %v2066
    %v2249 = vunpack.c.h.b16 %v2066
    %v2250 = vunpack.c.l.b16 %v2067
    %v2251 = vunpack.c.h.b16 %v2067
    %v2252 = vunpack.c.l.b16 %v2068
    %v2253 = vunpack.c.h.b16 %v2068
    %v2254 = vunpack.c.l.b16 %v2069
    %v2255 = vunpack.c.h.b16 %v2069
    %v2256 = vunpack.c.l.b16 %v2070
    %v2257 = vunpack.c.h.b16 %v2070
    %v2258 = vunpack.c.l.b16 %v2071
    %v2259 = vunpack.c.h.b16 %v2071
    %v2260 = vunpack.c.l.b16 %v2072
    %v2261 = vunpack.c.h.b16 %v2072
    %v2262 = vunpack.c.l.b16 %v2073
    %v2263 = vunpack.c.h.b16 %v2073
    %v2264 = vunpack.c.l.b16 %v2074
    %v2265 = vunpack.c.h.b16 %v2074
    %v2266 = vunpack.c.l.b16 %v2075
    %v2267 = vunpack.c.h.b16 %v2075
    %v2268 = vunpack.c.l.b16 %v2076
    %v2269 = vunpack.c.h.b16 %v2076
    %v2270 = vunpack.c.l.b16 %v2077
    %v2271 = vunpack.c.h.b16 %v2077
    %v2272 = vunpack.c.l.b16 %v2078
    %v2273 = vunpack.c.h.b16 %v2078
    %v2274 = vunpack.c.l.b16 %v2079
    %v2275 = vunpack.c.h.b16 %v2079
    %v2276 = vunpack.c.l.b16 %v2080
    %v2277 = vunpack.c.h.b16 %v2080
    %v2278 = vunpack.c.l.b16 %v2081
    %v2279 = vunpack.c.h.b16 %v2081
    %v2280 = vunpack.c.l.b16 %v2082
    %v2281 = vunpack.c.h.b16 %v2082
    %v2282 = vunpack.c.l.b16 %v2083
    %v2283 = vunpack.c.h.b16 %v2083
    %v2284 = vunpack.c.l.b16 %v2084
    %v2285 = vunpack.c.h.b16 %v2084
    %v2286 = vunpack.c.l.b16 %v2085
    %v2287 = vunpack.c.h.b16 %v2085
    %v2288 = vunpack.c.l.b16 %v2086
    %v2289 = vunpack.c.h.b16 %v2086
    %v2290 = vunpack.c.l.b16 %v2087
    %v2291 = vunpack.c.h.b16 %v2087
    %v2292 = vpack.c.b16 %v2166, %v2164
    %v2293 = vpack.c.b16 %v2167, %v2165
    %v2294 = vpack.c.b16 %v2170, %v2168
    %v2295 = vpack.c.b16 %v2171, %v2169
    %v2296 = vpack.c.b16 %v2174, %v2172
    %v2297 = vpack.c.b16 %v2175, %v2173
    %v2298 = vpack.c.b16 %v2178, %v2176
    %v2299 = vpack.c.b16 %v2179, %v2177
    %v2300 = vpack.c.b16 %v2182, %v2180
    %v2301 = vpack.c.b16 %v2183, %v2181
    %v2302 = vpack.c.b16 %v2186, %v2184
    %v2303 = vpack.c.b16 %v2187, %v2185
    %v2304 = vpack.c.b16 %v2190, %v2188
    %v2305 = vpack.c.b16 %v2191, %v2189
    %v2306 = vpack.c.b16 %v2194, %v2192
    %v2307 = vpack.c.b16 %v2195, %v2193
    %v2308 = vpack.c.b16 %v2198, %v2196
    %v2309 = vpack.c.b16 %v2199, %v2197
    %v2310 = vpack.c.b16 %v2202, %v2200
    %v2311 = vpack.c.b16 %v2203, %v2201
    %v2312 = vpack.c.b16 %v2206, %v2204
    %v2313 = vpack.c.b16 %v2207, %v2205
    %v2314 = vpack.c.b16 %v2210, %v2208
    %v2315 = vpack.c.b16 %v2211, %v2209
    %v2316 = vpack.c.b16 %v2214, %v2212
    %v2317 = vpack.c.b16 %v2215, %v2213
    %v2318 = vpack.c.b16 %v2218, %v2216
    %v2319 = vpack.c.b16 %v2219, %v2217
    %v2320 = vpack.c.b16 %v2222, %v2220
    %v2321 = vpack.c.b16 %v2223, %v2221
    %v2322 = vpack.c.b16 %v2226, %v2224
    %v2323 = vpack.c.b16 %v2227, %v2225
    %v2324 = vpack.c.b16 %v2230, %v2228
    %v2325 = vpack.c.b16 %v2231, %v2229
    %v2326 = vpack.c.b16 %v2234, %v2232
    %v2327 = vpack.c.b16 %v2235, %v2233
    %v2328 = vpack.c.b16 %v2238, %v2236
    %v2329 = vpack.c.b16 %v2239, %v2237
    %v2330 = vpack.c.b16 %v2242, %v2240
    %v2331 = vpack.c.b16 %v2243, %v2241
    %v2332 = vpack.c.b16 %v2246, %v2244
    %v2333 = vpack.c.b16 %v2247, %v2245
    %v2334 = vpack.c.b16 %v2250, %v2248
    %v2335 = vpack.c.b16 %v2251, %v2249
    %v2336 = vpack.c.b16 %v2254, %v2252
    %v2337 = vpack.c.b16 %v2255, %v2253
    %v2338 = vpack.c.b16 %v2258, %v2256
    %v2339 = vpack.c.b16 %v2259, %v2257
    %v2340 = vpack.c.b16 %v2262, %v2260
    %v2341 = vpack.c.b16 %v2263, %v2261
    %v2342 = vpack.c.b16 %v2266, %v2264
    %v2343 = vpack.c.b16 %v2267, %v2265
    %v2344 = vpack.c.b16 %v2270, %v2268
    %v2345 = vpack.c.b16 %v2271, %v2269
    %v2346 = vpack.c.b16 %v2274, %v2272
    %v2347 = vpack.c.b16 %v2275, %v2273
    %v2348 = vpack.c.b16 %v2278, %v2276
    %v2349 = vpack.c.b16 %v2279, %v2277
    %v2350 = vpack.c.b16 %v2282, %v2280
    %v2351 = vpack.c.b16 %v2283, %v2281
    %v2352 = vpack.c.b16 %v2286, %v2284
    %v2353 = vpack.c.b16 %v2287, %v2285
    %v2354 = vpack.c.b16 %v2290, %v2288
    %v2355 = vpack.c.b16 %v2291, %v2289
    %2420 = vmatprep.subr.bf16.mxu0 %v2307
    %2421 = vmatpush1.bf16.msra.mxu0 %v2306
    %2422 = vmatprep.subr.bf16.mxu0 %v2305
    %2423 = vmatpush1.bf16.msra.mxu0 %v2304
    %2424 = vmatprep.subr.bf16.mxu0 %v2303
    %2425 = vmatpush1.bf16.msra.mxu0 %v2302
    %2426 = vmatprep.subr.bf16.mxu0 %v2301
    %2427 = vmatpush1.bf16.msra.mxu0 %v2300
    %2428 = vmatprep.subr.bf16.mxu0 %v2299
    %2429 = vmatpush1.bf16.msra.mxu0 %v2298
    %2430 = vmatprep.subr.bf16.mxu0 %v2297
    %2431 = vmatpush1.bf16.msra.mxu0 %v2296
    %2432 = vmatprep.subr.bf16.mxu0 %v2295
    %2433 = vmatpush1.bf16.msra.mxu0 %v2294
    %2434 = vmatprep.subr.bf16.mxu0 %v2293
    %2435 = vmatpush1.bf16.msra.mxu0 %v2292
    %2436 = vmatprep.subr.bf16.mxu0 %v2323
    %2437 = vmatpush2.bf16.msra.mxu0 %v2322
    %2438 = vmatprep.subr.bf16.mxu0 %v2321
    %2439 = vmatpush2.bf16.msra.mxu0 %v2320
    %2440 = vmatprep.subr.bf16.mxu0 %v2319
    %2441 = vmatpush2.bf16.msra.mxu0 %v2318
    %2442 = vmatprep.subr.bf16.mxu0 %v2317
    %2443 = vmatpush2.bf16.msra.mxu0 %v2316
    %2444 = vmatprep.subr.bf16.mxu0 %v2315
    %2445 = vmatpush2.bf16.msra.mxu0 %v2314
    %2446 = vmatprep.subr.bf16.mxu0 %v2313
    %2447 = vmatpush2.bf16.msra.mxu0 %v2312
    %2448 = vmatprep.subr.bf16.mxu0 %v2311
    %2449 = vmatpush2.bf16.msra.mxu0 %v2310
    %2450 = vmatprep.subr.bf16.mxu0 %v2309
    %2451 = vmatpush2.bf16.msra.mxu0 %v2308
    %2452 = vmatprep.mubr.bf16.mxu0 %v2021
    %2453 = vmatmul.mubr.bf16.gmra.mxu0 %v2020
    %v2454 = vpop.f32.mrf.mxu0
    %v2455 = vadd.f32 %v2093, %v2454
    %v2456 = vpop.f32.mrf.mxu0
    %v2457 = vadd.f32 %v2097, %v2456
    %v2458 = vpop.f32.mrf.mxu0
    %v2459 = vpop.f32.mrf.mxu0
    %2460 = vdwg.mxu0
    %2461 = vmatprep.subr.bf16.mxu0 %v2339
    %2462 = vmatpush1.bf16.msra.mxu0 %v2338
    %2463 = vmatprep.subr.bf16.mxu0 %v2337
    %2464 = vmatpush1.bf16.msra.mxu0 %v2336
    %2465 = vmatprep.subr.bf16.mxu0 %v2335
    %2466 = vmatpush1.bf16.msra.mxu0 %v2334
    %2467 = vmatprep.subr.bf16.mxu0 %v2333
    %2468 = vmatpush1.bf16.msra.mxu0 %v2332
    %2469 = vmatprep.subr.bf16.mxu0 %v2331
    %2470 = vmatpush1.bf16.msra.mxu0 %v2330
    %2471 = vmatprep.subr.bf16.mxu0 %v2329
    %2472 = vmatpush1.bf16.msra.mxu0 %v2328
    %2473 = vmatprep.subr.bf16.mxu0 %v2327
    %2474 = vmatpush1.bf16.msra.mxu0 %v2326
    %2475 = vmatprep.subr.bf16.mxu0 %v2325
    %2476 = vmatpush1.bf16.msra.mxu0 %v2324
    %2477 = vmatprep.subr.bf16.mxu0 %v2355
    %2478 = vmatpush2.bf16.msra.mxu0 %v2354
    %2479 = vmatprep.subr.bf16.mxu0 %v2353
    %2480 = vmatpush2.bf16.msra.mxu0 %v2352
    %2481 = vmatprep.subr.bf16.mxu0 %v2351
    %2482 = vmatpush2.bf16.msra.mxu0 %v2350
    %2483 = vmatprep.subr.bf16.mxu0 %v2349
    %2484 = vmatpush2.bf16.msra.mxu0 %v2348
    %2485 = vmatprep.subr.bf16.mxu0 %v2347
    %2486 = vmatpush2.bf16.msra.mxu0 %v2346
    %2487 = vmatprep.subr.bf16.mxu0 %v2345
    %2488 = vmatpush2.bf16.msra.mxu0 %v2344
    %2489 = vmatprep.subr.bf16.mxu0 %v2343
    %2490 = vmatpush2.bf16.msra.mxu0 %v2342
    %2491 = vmatprep.subr.bf16.mxu0 %v2341
    %2492 = vmatpush2.bf16.msra.mxu0 %v2340
    %2493 = vmatprep.mubr.bf16.mxu0 %v2023
    %2494 = vmatmul.mubr.bf16.gmra.mxu0 %v2022
    %v2495 = vpop.f32.mrf.mxu0
    %v2496 = vadd.f32 %v2455, %v2495
    %v2497 = vpop.f32.mrf.mxu0
    %v2498 = vadd.f32 %v2457, %v2497
    %v2499 = vpop.f32.mrf.mxu0
    %v2500 = vpop.f32.mrf.mxu0
    %2501 = vdwg.mxu0
    %v2502 = vmax.f32 %v2496, 0.0
    %v2503 = vmax.f32 %v2498, 0.0
    %2504 = vxpose.xlu0.b32.start [1/16] %v2502, 128
    %2505 = vxpose.xlu0.b32.cont [2/16] 0.0, 128
    %2506 = vxpose.xlu0.b32.cont [3/16] 0.0, 128
    %2507 = vxpose.xlu0.b32.cont [4/16] 0.0, 128
    %2508 = vxpose.xlu0.b32.cont [5/16] 0.0, 128
    %2509 = vxpose.xlu0.b32.cont [6/16] 0.0, 128
    %2510 = vxpose.xlu0.b32.cont [7/16] 0.0, 128
    %2511 = vxpose.xlu0.b32.cont [8/16] 0.0, 128
    %2512 = vxpose.xlu0.b32.cont [9/16] 0.0, 128
    %2513 = vxpose.xlu0.b32.cont [10/16] 0.0, 128
    %2514 = vxpose.xlu0.b32.cont [11/16] 0.0, 128
    %2515 = vxpose.xlu0.b32.cont [12/16] 0.0, 128
    %2516 = vxpose.xlu0.b32.cont [13/16] 0.0, 128
    %2517 = vxpose.xlu0.b32.cont [14/16] 0.0, 128
    %2518 = vxpose.xlu0.b32.cont [15/16] 0.0, 128
    %2519 = vxpose.xlu0.b32.end [16/16] 0.0, 128
    %v2520 = vpop.trf.xlu0
    %v2521 = vpop.trf.xlu0
    %v2522 = vpop.trf.xlu0
    %v2523 = vpop.trf.xlu0
    %v2524 = vpop.trf.xlu0
    %v2525 = vpop.trf.xlu0
    %v2526 = vpop.trf.xlu0
    %v2527 = vpop.trf.xlu0
    %v2528 = vpop.trf.xlu0
    %v2529 = vpop.trf.xlu0
    %v2530 = vpop.trf.xlu0
    %v2531 = vpop.trf.xlu0
    %v2532 = vpop.trf.xlu0
    %v2533 = vpop.trf.xlu0
    %v2534 = vpop.trf.xlu0
    %v2535 = vpop.trf.xlu0
    %2536 = vxpose.xlu0.b32.start [1/16] %v2503, 128
    %2537 = vxpose.xlu0.b32.cont [2/16] 0.0, 128
    %2538 = vxpose.xlu0.b32.cont [3/16] 0.0, 128
    %2539 = vxpose.xlu0.b32.cont [4/16] 0.0, 128
    %2540 = vxpose.xlu0.b32.cont [5/16] 0.0, 128
    %2541 = vxpose.xlu0.b32.cont [6/16] 0.0, 128
    %2542 = vxpose.xlu0.b32.cont [7/16] 0.0, 128
    %2543 = vxpose.xlu0.b32.cont [8/16] 0.0, 128
    %2544 = vxpose.xlu0.b32.cont [9/16] 0.0, 128
    %2545 = vxpose.xlu0.b32.cont [10/16] 0.0, 128
    %2546 = vxpose.xlu0.b32.cont [11/16] 0.0, 128
    %2547 = vxpose.xlu0.b32.cont [12/16] 0.0, 128
    %2548 = vxpose.xlu0.b32.cont [13/16] 0.0, 128
    %2549 = vxpose.xlu0.b32.cont [14/16] 0.0, 128
    %2550 = vxpose.xlu0.b32.cont [15/16] 0.0, 128
    %2551 = vxpose.xlu0.b32.end [16/16] 0.0, 128
    %v2552 = vpop.trf.xlu0
    %v2553 = vpop.trf.xlu0
    %v2554 = vpop.trf.xlu0
    %v2555 = vpop.trf.xlu0
    %v2556 = vpop.trf.xlu0
    %v2557 = vpop.trf.xlu0
    %v2558 = vpop.trf.xlu0
    %v2559 = vpop.trf.xlu0
    %v2560 = vpop.trf.xlu0
    %v2561 = vpop.trf.xlu0
    %v2562 = vpop.trf.xlu0
    %v2563 = vpop.trf.xlu0
    %v2564 = vpop.trf.xlu0
    %v2565 = vpop.trf.xlu0
    %v2566 = vpop.trf.xlu0
    %v2567 = vpop.trf.xlu0
    %v2568 = vld [vmem:[%s7] sm:$0xff]
    %v2569 = vld [vmem:[%s7 + $0x8] sm:$0xff]
    %v2570 = vld [vmem:[%s7 + $0x10] sm:$0xff]
    %v2571 = vld [vmem:[%s7 + $0x18] sm:$0xff]
    %v2572 = vld [vmem:[%s7 + $0x20] sm:$0xff]
    %v2573 = vld [vmem:[%s7 + $0x28] sm:$0xff]
    %v2574 = vld [vmem:[%s7 + $0x30] sm:$0xff]
    %v2575 = vld [vmem:[%s7 + $0x38] sm:$0xff]
    %v2576 = vld [vmem:[%s7 + $0x40] sm:$0xff]
    %v2577 = vld [vmem:[%s7 + $0x48] sm:$0xff]
    %v2578 = vld [vmem:[%s7 + $0x50] sm:$0xff]
    %v2579 = vld [vmem:[%s7 + $0x58] sm:$0xff]
    %v2580 = vld [vmem:[%s7 + $0x60] sm:$0xff]
    %v2581 = vld [vmem:[%s7 + $0x68] sm:$0xff]
    %v2582 = vld [vmem:[%s7 + $0x70] sm:$0xff]
    %v2583 = vld [vmem:[%s7 + $0x78] sm:$0xff]
    %v2584 = vld [vmem:[%s7 + $0x80] sm:$0xff]
    %v2585 = vld [vmem:[%s7 + $0x88] sm:$0xff]
    %v2586 = vld [vmem:[%s7 + $0x90] sm:$0xff]
    %v2587 = vld [vmem:[%s7 + $0x98] sm:$0xff]
    %v2588 = vld [vmem:[%s7 + $0xa0] sm:$0xff]
    %v2589 = vld [vmem:[%s7 + $0xa8] sm:$0xff]
    %v2590 = vld [vmem:[%s7 + $0xb0] sm:$0xff]
    %v2591 = vld [vmem:[%s7 + $0xb8] sm:$0xff]
    %v2592 = vld [vmem:[%s7 + $0xc0] sm:$0xff]
    %v2593 = vld [vmem:[%s7 + $0xc8] sm:$0xff]
    %v2594 = vld [vmem:[%s7 + $0xd0] sm:$0xff]
    %v2595 = vld [vmem:[%s7 + $0xd8] sm:$0xff]
    %v2596 = vld [vmem:[%s7 + $0xe0] sm:$0xff]
    %v2597 = vld [vmem:[%s7 + $0xe8] sm:$0xff]
    %v2598 = vld [vmem:[%s7 + $0xf0] sm:$0xff]
    %v2599 = vld [vmem:[%s7 + $0xf8] sm:$0xff]
    %2601 = vset.pattern.permute.xlu0 0
    %2602 = vperm.xlu0 %2601, %v2568
    %v2603 = vpop.permute.xlu0 %2602
    %2606 = vset.pattern.permute.xlu0 0
    %2607 = vperm.xlu0 %2606, %v2569
    %v2608 = vpop.permute.xlu0 %2607
    %2611 = vset.pattern.permute.xlu0 0
    %2612 = vperm.xlu0 %2611, %v2570
    %v2613 = vpop.permute.xlu0 %2612
    %2616 = vset.pattern.permute.xlu0 0
    %2617 = vperm.xlu0 %2616, %v2571
    %v2618 = vpop.permute.xlu0 %2617
    %2621 = vset.pattern.permute.xlu0 0
    %2622 = vperm.xlu0 %2621, %v2572
    %v2623 = vpop.permute.xlu0 %2622
    %2626 = vset.pattern.permute.xlu0 0
    %2627 = vperm.xlu0 %2626, %v2573
    %v2628 = vpop.permute.xlu0 %2627
    %2631 = vset.pattern.permute.xlu0 0
    %2632 = vperm.xlu0 %2631, %v2574
    %v2633 = vpop.permute.xlu0 %2632
    %2636 = vset.pattern.permute.xlu0 0
    %2637 = vperm.xlu0 %2636, %v2575
    %v2638 = vpop.permute.xlu0 %2637
    %2641 = vset.pattern.permute.xlu0 0
    %2642 = vperm.xlu0 %2641, %v2576
    %v2643 = vpop.permute.xlu0 %2642
    %2646 = vset.pattern.permute.xlu0 0
    %2647 = vperm.xlu0 %2646, %v2577
    %v2648 = vpop.permute.xlu0 %2647
    %2651 = vset.pattern.permute.xlu0 0
    %2652 = vperm.xlu0 %2651, %v2578
    %v2653 = vpop.permute.xlu0 %2652
    %2656 = vset.pattern.permute.xlu0 0
    %2657 = vperm.xlu0 %2656, %v2579
    %v2658 = vpop.permute.xlu0 %2657
    %2661 = vset.pattern.permute.xlu0 0
    %2662 = vperm.xlu0 %2661, %v2580
    %v2663 = vpop.permute.xlu0 %2662
    %2666 = vset.pattern.permute.xlu0 0
    %2667 = vperm.xlu0 %2666, %v2581
    %v2668 = vpop.permute.xlu0 %2667
    %2671 = vset.pattern.permute.xlu0 0
    %2672 = vperm.xlu0 %2671, %v2582
    %v2673 = vpop.permute.xlu0 %2672
    %2676 = vset.pattern.permute.xlu0 0
    %2677 = vperm.xlu0 %2676, %v2583
    %v2678 = vpop.permute.xlu0 %2677
    %2681 = vset.pattern.permute.xlu0 0
    %2682 = vperm.xlu0 %2681, %v2584
    %v2683 = vpop.permute.xlu0 %2682
    %2686 = vset.pattern.permute.xlu0 0
    %2687 = vperm.xlu0 %2686, %v2585
    %v2688 = vpop.permute.xlu0 %2687
    %2691 = vset.pattern.permute.xlu0 0
    %2692 = vperm.xlu0 %2691, %v2586
    %v2693 = vpop.permute.xlu0 %2692
    %2696 = vset.pattern.permute.xlu0 0
    %2697 = vperm.xlu0 %2696, %v2587
    %v2698 = vpop.permute.xlu0 %2697
    %2701 = vset.pattern.permute.xlu0 0
    %2702 = vperm.xlu0 %2701, %v2588
    %v2703 = vpop.permute.xlu0 %2702
    %2706 = vset.pattern.permute.xlu0 0
    %2707 = vperm.xlu0 %2706, %v2589
    %v2708 = vpop.permute.xlu0 %2707
    %2711 = vset.pattern.permute.xlu0 0
    %2712 = vperm.xlu0 %2711, %v2590
    %v2713 = vpop.permute.xlu0 %2712
    %2716 = vset.pattern.permute.xlu0 0
    %2717 = vperm.xlu0 %2716, %v2591
    %v2718 = vpop.permute.xlu0 %2717
    %2721 = vset.pattern.permute.xlu0 0
    %2722 = vperm.xlu0 %2721, %v2592
    %v2723 = vpop.permute.xlu0 %2722
    %2726 = vset.pattern.permute.xlu0 0
    %2727 = vperm.xlu0 %2726, %v2593
    %v2728 = vpop.permute.xlu0 %2727
    %2731 = vset.pattern.permute.xlu0 0
    %2732 = vperm.xlu0 %2731, %v2594
    %v2733 = vpop.permute.xlu0 %2732
    %2736 = vset.pattern.permute.xlu0 0
    %2737 = vperm.xlu0 %2736, %v2595
    %v2738 = vpop.permute.xlu0 %2737
    %2741 = vset.pattern.permute.xlu0 0
    %2742 = vperm.xlu0 %2741, %v2596
    %v2743 = vpop.permute.xlu0 %2742
    %2746 = vset.pattern.permute.xlu0 0
    %2747 = vperm.xlu0 %2746, %v2597
    %v2748 = vpop.permute.xlu0 %2747
    %2751 = vset.pattern.permute.xlu0 0
    %2752 = vperm.xlu0 %2751, %v2598
    %v2753 = vpop.permute.xlu0 %2752
    %2756 = vset.pattern.permute.xlu0 0
    %2757 = vperm.xlu0 %2756, %v2599
    %v2758 = vpop.permute.xlu0 %2757
    %v2760 = vmul.f32 %v2520, %v2603
    %v2761 = vmul.f32 %v2521, %v2608
    %v2762 = vmul.f32 %v2522, %v2613
    %v2763 = vmul.f32 %v2523, %v2618
    %v2764 = vmul.f32 %v2524, %v2623
    %v2765 = vmul.f32 %v2525, %v2628
    %v2766 = vmul.f32 %v2526, %v2633
    %v2767 = vmul.f32 %v2527, %v2638
    %v2768 = vmul.f32 %v2528, %v2643
    %v2769 = vmul.f32 %v2529, %v2648
    %v2770 = vmul.f32 %v2530, %v2653
    %v2771 = vmul.f32 %v2531, %v2658
    %v2772 = vmul.f32 %v2532, %v2663
    %v2773 = vmul.f32 %v2533, %v2668
    %v2774 = vmul.f32 %v2534, %v2673
    %v2775 = vmul.f32 %v2535, %v2678
    %v2776 = vmul.f32 %v2552, %v2683
    %v2777 = vmul.f32 %v2553, %v2688
    %v2778 = vmul.f32 %v2554, %v2693
    %v2779 = vmul.f32 %v2555, %v2698
    %v2780 = vmul.f32 %v2556, %v2703
    %v2781 = vmul.f32 %v2557, %v2708
    %v2782 = vmul.f32 %v2558, %v2713
    %v2783 = vmul.f32 %v2559, %v2718
    %v2784 = vmul.f32 %v2560, %v2723
    %v2785 = vmul.f32 %v2561, %v2728
    %v2786 = vmul.f32 %v2562, %v2733
    %v2787 = vmul.f32 %v2563, %v2738
    %v2788 = vmul.f32 %v2564, %v2743
    %v2789 = vmul.f32 %v2565, %v2748
    %v2790 = vmul.f32 %v2566, %v2753
    %v2791 = vmul.f32 %v2567, %v2758
    %vm2792 = vcmask 64512
    %v2793 = vsel %vm2792, %v2760, 0.0
    %v2794 = vsel %vm2792, %v2761, 0.0
    %v2795 = vadd.f32 %v2793, %v2794
    %v2796 = vsel %vm2792, %v2762, 0.0
    %v2797 = vadd.f32 %v2795, %v2796
    %v2798 = vsel %vm2792, %v2763, 0.0
    %v2799 = vadd.f32 %v2797, %v2798
    %v2800 = vsel %vm2792, %v2764, 0.0
    %v2801 = vadd.f32 %v2799, %v2800
    %v2802 = vsel %vm2792, %v2765, 0.0
    %v2803 = vadd.f32 %v2801, %v2802
    %v2804 = vsel %vm2792, %v2766, 0.0
    %v2805 = vadd.f32 %v2803, %v2804
    %v2806 = vsel %vm2792, %v2767, 0.0
    %v2807 = vadd.f32 %v2805, %v2806
    %v2808 = vsel %vm2792, %v2768, 0.0
    %v2809 = vadd.f32 %v2807, %v2808
    %v2810 = vsel %vm2792, %v2769, 0.0
    %v2811 = vadd.f32 %v2809, %v2810
    %v2812 = vsel %vm2792, %v2770, 0.0
    %v2813 = vadd.f32 %v2811, %v2812
    %v2814 = vsel %vm2792, %v2771, 0.0
    %v2815 = vadd.f32 %v2813, %v2814
    %v2816 = vsel %vm2792, %v2772, 0.0
    %v2817 = vadd.f32 %v2815, %v2816
    %v2818 = vsel %vm2792, %v2773, 0.0
    %v2819 = vadd.f32 %v2817, %v2818
    %v2820 = vsel %vm2792, %v2774, 0.0
    %v2821 = vadd.f32 %v2819, %v2820
    %v2822 = vsel %vm2792, %v2775, 0.0
    %v2823 = vadd.f32 %v2821, %v2822
    %v2824 = vsel %vm2792, %v2776, 0.0
    %v2825 = vadd.f32 %v2823, %v2824
    %v2826 = vsel %vm2792, %v2777, 0.0
    %v2827 = vadd.f32 %v2825, %v2826
    %v2828 = vsel %vm2792, %v2778, 0.0
    %v2829 = vadd.f32 %v2827, %v2828
    %v2830 = vsel %vm2792, %v2779, 0.0
    %v2831 = vadd.f32 %v2829, %v2830
    %v2832 = vsel %vm2792, %v2780, 0.0
    %v2833 = vadd.f32 %v2831, %v2832
    %v2834 = vsel %vm2792, %v2781, 0.0
    %v2835 = vadd.f32 %v2833, %v2834
    %v2836 = vsel %vm2792, %v2782, 0.0
    %v2837 = vadd.f32 %v2835, %v2836
    %v2838 = vsel %vm2792, %v2783, 0.0
    %v2839 = vadd.f32 %v2837, %v2838
    %v2840 = vsel %vm2792, %v2784, 0.0
    %v2841 = vadd.f32 %v2839, %v2840
    %v2842 = vsel %vm2792, %v2785, 0.0
    %v2843 = vadd.f32 %v2841, %v2842
    %v2844 = vsel %vm2792, %v2786, 0.0
    %v2845 = vadd.f32 %v2843, %v2844
    %v2846 = vsel %vm2792, %v2787, 0.0
    %v2847 = vadd.f32 %v2845, %v2846
    %v2848 = vsel %vm2792, %v2788, 0.0
    %v2849 = vadd.f32 %v2847, %v2848
    %v2850 = vsel %vm2792, %v2789, 0.0
    %v2851 = vadd.f32 %v2849, %v2850
    %v2852 = vsel %vm2792, %v2790, 0.0
    %v2853 = vadd.f32 %v2851, %v2852
    %v2854 = vsel %vm2792, %v2791, 0.0
    %v2855 = vadd.f32 %v2853, %v2854
    %v2856 = vrot.slane %v2855, 4
    %v2857 = vadd.f32 %v2855, %v2856
    %v2858 = vrot.slane %v2857, 2
    %v2859 = vadd.f32 %v2857, %v2858
    %v2860 = vrot.slane %v2859, 1
    %v2861 = vadd.f32 %v2859, %v2860
    %v2862 = vld [vmem:[#allocation2] sm:$0x1]
    %2864 = vset.pattern.permute.xlu0 0
    %2865 = vperm.xlu0 %2864, %v2862
    %v2866 = vpop.permute.xlu0 %2865
    %v2868 = vlaneseq
    %v2869 = vshrl.u32 %v2868, 7
    %v2870 = vsub.s32 0, %v2869
    %v2871 = vrot.slane %v2866, %v2870
    %v2872 = vadd.f32 %v2861, %v2871
    %vm2873 = vcmask 57344
    %2874 = vst.msk [vmem:[#allocation9] sm:$0x1] %vm2873, %v2872
    // Predicated region
    $region50: #{tpu_custom_call.1} parent=1 // pred_check
      _
    $region51: #{tpu_custom_call.1} parent=1 // pred_check_branch
      %2876 = sbr.rel (0) target = $region53
    $region52: #{tpu_custom_call.1} parent=1 // pred_region
      %s2878 = ssub.s32 16, 16
      %2879 = vsyncadd [#allocation5], %s2878
      %s2881 = sshll.u32 [#allocation9], 4
      %s2882 = int_to_ptr.vmem [resolvable:$true] %s2881
      %2884 = dma.vmem_to_hbm [thread:$0]  %s2882, 16, %s9, [#allocation5]
    $region53: #{tpu_custom_call.1} parent=1 // pred_fallthru
      _
    // Predicated region
    $region54: #{tpu_custom_call.1} parent=1 // pred_check
      _
    $region55: #{tpu_custom_call.1} parent=1 // pred_check_branch
      %2886 = sbr.rel (0) target = $region57
    $region56: #{tpu_custom_call.1} parent=1 // pred_region
      %2887 = dma.done [#allocation5], 16
    $region57: #{tpu_custom_call.1} parent=1 // pred_fallthru
      _
    %2888 = vsyncpa [#allocation4], 1
    %2889 = vsyncpa [#allocation7], 1
    %2890 = vsyncpa [#allocation5], 1

</llo_original>
